<compile_context>
chip_gen: v7x
topology: tpu7x:2x2x1
jax: 0.10.0
libtpu: 0.0.40
codegen_flags: <defaults>
</compile_context>

<pallas_src>
import functools

import jax
import jax.numpy as jnp
import numpy as np
from jax import lax
from jax.experimental import pallas as pl
from jax.experimental.pallas import tpu as pltpu


def _sigmoid(v):
    # numerically stable: never exponentiates a large positive number
    e = jnp.exp(-jnp.abs(v))
    r = 1.0 / (1.0 + e)
    return jnp.where(v >= 0, r, 1.0 - r)


def _silu(v):
    return v * _sigmoid(v)


def _mbconv_kernel(
    xh_ref,        # (1, CP, XW)  zero-haloed, channel-padded, spatially-flattened input
    wexp_ref,      # (Chid, 9*CP) expand weights, BN scale folded, im2col layout
    wproj_ref,     # (Cout, Chid) projection weights, BN scale folded
    cvec_ref,      # (Chid, 3+9+2*red): [bias_e | bias_d | b_se2 | wd taps | w_se1 | w_se2^T]
    bse1_ref,      # (1, red)
    biasp_ref,     # (Cout, 1)
    out_ref,       # (1, Cout, HW)
    xcol_ref,      # VMEM (9*CP, HW)   im2col scratch
    h1p_ref,       # VMEM (Chid, XW)   haloed expand activations
    *, W, HW, CP, red, use_residual,
):
    f32 = jnp.float32
    Chid = h1p_ref.shape[0]
    Cout = wproj_ref.shape[0]
    HALO = W + 1

    # Column masks over flattened output positions (handle horizontal conv padding,
    # which in the flat layout would otherwise wrap across rows).
    wcol = lax.broadcasted_iota(jnp.int32, (1, HW), 1) % W
    mask_l = (wcol > 0).astype(f32)          # dx == 0 taps invalid at w == 0
    mask_r = (wcol < (W - 1)).astype(f32)    # dx == 2 taps invalid at w == W-1

    # ---- expand 3x3 conv: im2col -> one MXU matmul, + BN bias + SiLU -----------------
    for k in range(9):
        dy, dx = k // 3, k % 3
        off = dy * W + dx
        sl = xh_ref[0, :, off:off + HW].astype(f32)      # (CP, HW)
        if dx == 0:
            sl = sl * mask_l
        elif dx == 2:
            sl = sl * mask_r
        xcol_ref[k * CP:(k + 1) * CP, :] = sl

    bias_e = cvec_ref[:, 0:1]                            # (Chid, 1)
    h1 = jnp.dot(wexp_ref[...], xcol_ref[...], preferred_element_type=f32) + bias_e
    h1 = _silu(h1)                                       # (Chid, HW)

    # Place h1 in the haloed scratch; the zero halo is the depthwise conv's vertical
    # padding.  Only the tiny halo strips are zeroed (per step -> safe under "parallel").
    h1p_ref[:, 0:HALO] = jnp.zeros((Chid, HALO), f32)
    h1p_ref[:, HALO + HW:HALO + HW + HALO] = jnp.zeros((Chid, HALO), f32)
    h1p_ref[:, HALO:HALO + HW] = h1

    # ---- depthwise 3x3 conv + BN bias + SiLU (VPU; taps grouped by dx for masking) ----
    bias_d = cvec_ref[:, 1:2]
    dw = jnp.zeros((Chid, HW), f32)
    for dx in range(3):
        col = jnp.zeros((Chid, HW), f32)
        for dy in range(3):
            k = dy * 3 + dx
            off = dy * W + dx
            col = col + cvec_ref[:, 3 + k:4 + k] * h1p_ref[:, off:off + HW]
        if dx == 0:
            col = col * mask_l
        elif dx == 2:
            col = col * mask_r
        dw = dw + col
    h2 = _silu(dw + bias_d)                              # (Chid, HW)

    # ---- squeeze-excitation: VPU multiplies + lane/sublane reduces (no MXU) -----------
    w_se1 = cvec_ref[:, 12:12 + red]                     # (Chid, red)
    w_se2 = cvec_ref[:, 12 + red:12 + 2 * red]           # (Chid, red)
    b_se2 = cvec_ref[:, 2:3]                             # (Chid, 1)
    pooled = jnp.sum(h2, axis=1, keepdims=True) * (1.0 / HW)               # (Chid, 1)
    s1 = jnp.sum(w_se1 * pooled, axis=0, keepdims=True) + bse1_ref[...]    # (1, red)
    s1 = _silu(s1)
    gate = _sigmoid(jnp.sum(w_se2 * s1, axis=1, keepdims=True) + b_se2)    # (Chid, 1)
    h3 = h2 * gate

    # ---- 1x1 projection + BN bias (+ residual; eval-mode stochastic depth = id) -------
    out = jnp.dot(wproj_ref[...], h3, preferred_element_type=f32) + biasp_ref[...]
    if use_residual:
        out = out + xh_ref[0, 0:Cout, HALO:HALO + HW].astype(f32)
    out_ref[0] = out.astype(out_ref.dtype)               # lane-dense (Cout, HW) store


def _round_up(v, m):
    return (v + m - 1) // m * m


@functools.partial(jax.jit, static_argnames=("use_residual",))
def inverted_residual_forward(x, params, use_residual=True):
    """Fused MBConv forward.  x: NCHW float32."""
    N, Cin, H, W = x.shape
    HW = H * W
    CP = _round_up(Cin, 8)        # channel padding so im2col sublane stores are aligned
    HALO = W + 1                  # flat halo so all 3x3 tap reads stay in-bounds
    XW = HW + 2 * HALO

    w_exp = params["w_exp"]                       # (3, 3, Cin, Chid)  HWIO
    Chid = w_exp.shape[-1]
    w_proj = params["w_proj"]                     # (Chid, Cout)
    Cout = w_proj.shape[-1]
    w_se1 = params["w_se1"]                       # (Chid, red)
    red = w_se1.shape[-1]
    if use_residual:
        assert Cin == Cout

    # ---- trace-time folding / packing of parameters --------------------------------
    w_exp_f = (w_exp * params["scale_e"]).transpose(3, 0, 1, 2).reshape(Chid, 9, Cin)
    w_exp_cat = jnp.pad(w_exp_f, ((0, 0), (0, 0), (0, CP - Cin))).reshape(Chid, 9 * CP)
    wd_f = (params["wd"] * params["scale_d"]).reshape(9, Chid).T           # (Chid, 9)
    w_proj_f = (w_proj * params["scale_p"]).T                              # (Cout, Chid)

    cvec = jnp.concatenate(
        [params["bias_e"][:, None], params["bias_d"][:, None],
         params["b_se2"][:, None], wd_f, w_se1, params["w_se2"].T],
        axis=1)                                                            # (Chid, 12+2*red)
    b_se1 = params["b_se1"].reshape(1, red)
    bias_p = params["bias_p"].reshape(Cout, 1)

    # ---- input: NCHW -> (N, CP, halo + H*W + halo), flat row-major spatial ----------
    xh = jnp.pad(x.reshape(N, Cin, HW), ((0, 0), (0, CP - Cin), (HALO, HALO)))

    kernel = functools.partial(_mbconv_kernel, W=W, HW=HW, CP=CP, red=red,
                               use_residual=use_residual)

    def full(shape):
        return pl.BlockSpec(shape, lambda n: (0,) * len(shape))

    out = pl.pallas_call(
        kernel,
        out_shape=jax.ShapeDtypeStruct((N, Cout, HW), x.dtype),
        grid_spec=pltpu.PrefetchScalarGridSpec(
            num_scalar_prefetch=0,
            grid=(N,),
            in_specs=[
                pl.BlockSpec((1, CP, XW), lambda n: (n, 0, 0)),   # haloed input
                full((Chid, 9 * CP)),                             # expand weights (im2col)
                full((Cout, Chid)),                               # projection weights
                full((Chid, 12 + 2 * red)),                       # packed per-channel params
                full((1, red)),                                   # SE reduce bias
                full((Cout, 1)),                                  # projection bias
            ],
            out_specs=pl.BlockSpec((1, Cout, HW), lambda n: (n, 0, 0)),
            scratch_shapes=[
                pltpu.VMEM((9 * CP, HW), jnp.float32),            # im2col slab
                pltpu.VMEM((Chid, XW), jnp.float32),              # haloed h1
            ],
        ),
        compiler_params=pltpu.CompilerParams(
            dimension_semantics=("parallel",),
        ),
    )(xh, w_exp_cat, w_proj_f, cvec, b_se1, bias_p)

    return out.reshape(N, Cout, H, W)                             # free reshape, no transpose


def _reference_forward(x, params, use_residual=True):
    """Pure-JAX f32 (HIGHEST precision) reference of the eval-mode InvertdResidualBlock."""
    hp = lax.Precision.HIGHEST
    chid = params["w_exp"].shape[-1]
    dn = ("NHWC", "HWIO", "NHWC")
    xh = jnp.transpose(x, (0, 2, 3, 1))
    h = lax.conv_general_dilated(xh, params["w_exp"], (1, 1), [(1, 1), (1, 1)],
                                 dimension_numbers=dn, precision=hp)
    h = h * params["scale_e"] + params["bias_e"]
    h = h * jax.nn.sigmoid(h)
    wd = params["wd"].reshape(3, 3, 1, chid)
    h2 = lax.conv_general_dilated(h, wd, (1, 1), [(1, 1), (1, 1)],
                                  dimension_numbers=dn,
                                  feature_group_count=chid, precision=hp)
    h2 = h2 * params["scale_d"] + params["bias_d"]
    h2 = h2 * jax.nn.sigmoid(h2)
    pooled = jnp.mean(h2, axis=(1, 2))
    s1 = jnp.dot(pooled, params["w_se1"], precision=hp) + params["b_se1"]
    s1 = s1 * jax.nn.sigmoid(s1)
    gate = jax.nn.sigmoid(jnp.dot(s1, params["w_se2"], precision=hp)
                          + params["b_se2"])
    h3 = h2 * gate[:, None, None, :]
    out = jnp.einsum("nhwc,co->nhwo", h3, params["w_proj"], precision=hp)
    out = out * params["scale_p"] + params["bias_p"]
    if use_residual:
        out = out + xh
    return jnp.transpose(out, (0, 3, 1, 2))


if __name__ == "__main__":
    key = jax.random.PRNGKey(0)
    # InvertdResidualBlock(in=4, out=4, kernel_size=3, stride=1, padding=1,
    #                      expand_ratio=6, reduction=4) -> use_residual path, eval mode.
    N, Cin, H, W = 2, 4, 16, 16
    expand_ratio, reduction = 6, 4
    Chid = Cin * expand_ratio                 # 24
    Cout = Cin                                # stride 1, equal channels -> residual
    red = max(1, Cin // reduction)            # int(in_channels / reduction) = 1
    eps = 1e-5

    ks = jax.random.split(key, 20)

    def bn_fold(kg, kb, km, kv, ch):
        gamma = 1.0 + 0.1 * jax.random.normal(kg, (ch,), jnp.float32)
        beta = 0.1 * jax.random.normal(kb, (ch,), jnp.float32)
        mean = 0.1 * jax.random.normal(km, (ch,), jnp.float32)
        var = 0.5 + jnp.abs(jax.random.normal(kv, (ch,), jnp.float32))
        scale = gamma * lax.rsqrt(var + eps)
        return scale, beta - mean * scale

    scale_e, bias_e = bn_fold(ks[1], ks[2], ks[3], ks[4], Chid)
    scale_d, bias_d = bn_fold(ks[6], ks[7], ks[8], ks[9], Chid)
    scale_p, bias_p = bn_fold(ks[15], ks[16], ks[17], ks[18], Cout)

    params = {
        "w_exp": 0.3 * jax.random.normal(ks[0], (3, 3, Cin, Chid), jnp.float32),
        "scale_e": scale_e, "bias_e": bias_e,
        "wd": 0.3 * jax.random.normal(ks[5], (3, 3, Chid), jnp.float32),
        "scale_d": scale_d, "bias_d": bias_d,
        "w_se1": 0.3 * jax.random.normal(ks[10], (Chid, red), jnp.float32),
        "b_se1": 0.1 * jax.random.normal(ks[11], (red,), jnp.float32),
        "w_se2": 0.3 * jax.random.normal(ks[12], (red, Chid), jnp.float32),
        "b_se2": 0.1 * jax.random.normal(ks[13], (Chid,), jnp.float32),
        "w_proj": 0.3 * jax.random.normal(ks[14], (Chid, Cout), jnp.float32),
        "scale_p": scale_p, "bias_p": bias_p,
    }

    x = jax.random.normal(ks[19], (N, Cin, H, W), jnp.float32)

    y = jax.block_until_ready(inverted_residual_forward(x, params, use_residual=True))
    y_ref = jax.block_until_ready(_reference_forward(x, params, use_residual=True))

    assert y.shape == (N, Cout, H, W) and y.dtype == x.dtype
    # Kernel matmuls run at the TPU default (single-pass bf16 operand) MXU precision per the
    # performance review; tolerance vs the f32 (HIGHEST) reference is sized accordingly.
    np.testing.assert_allclose(np.asarray(y), np.asarray(y_ref), rtol=2e-2, atol=2e-2)
    print("KERNEL_OK")
</pallas_src>

<mosaic_0001>
module attributes {stable_mosaic.version = 11 : i64} {
  func.func @_mbconv_kernel(%arg0: i32, %arg1: memref<1x8x290xf32, #tpu.memory_space<vmem>>, %arg2: memref<24x72xf32, #tpu.memory_space<vmem>>, %arg3: memref<4x24xf32, #tpu.memory_space<vmem>>, %arg4: memref<24x14xf32, #tpu.memory_space<vmem>>, %arg5: memref<1x1xf32, #tpu.memory_space<vmem>>, %arg6: memref<4x1xf32, #tpu.memory_space<vmem>>, %arg7: memref<1x4x256xf32, #tpu.memory_space<vmem>>, %arg8: memref<72x256xf32, #tpu.memory_space<vmem>>, %arg9: memref<24x290xf32, #tpu.memory_space<vmem>>) attributes {dimension_semantics = [#tpu.dimension_semantics<parallel>], iteration_bounds = array<i64: 2>, scalar_prefetch = 0 : i64, scratch_operands = 2 : i64, tpu.core_type = #tpu.core_type<tc>, window_params = [{transform_indices = @transform_0, window_bounds = array<i64: 1, 8, 290>}, {pipeline_mode = #tpu.pipeline_mode<synchronous>, transform_indices = @transform_1, window_bounds = array<i64: 24, 72>}, {pipeline_mode = #tpu.pipeline_mode<synchronous>, transform_indices = @transform_2, window_bounds = array<i64: 4, 24>}, {pipeline_mode = #tpu.pipeline_mode<synchronous>, transform_indices = @transform_3, window_bounds = array<i64: 24, 14>}, {pipeline_mode = #tpu.pipeline_mode<synchronous>, transform_indices = @transform_4, window_bounds = array<i64: 1, 1>}, {pipeline_mode = #tpu.pipeline_mode<synchronous>, transform_indices = @transform_5, window_bounds = array<i64: 4, 1>}, {transform_indices = @transform_6, window_bounds = array<i64: 1, 4, 256>}]} {
    %0 = tpu.iota {dimensions = array<i32: 1>} : vector<1x256xi32>
    %c16_i32 = arith.constant 16 : i32
    %c0_i32 = arith.constant 0 : i32
    %1 = arith.cmpi eq, %c16_i32, %c0_i32 : i32
    %c1_i32 = arith.constant 1 : i32
    %2 = arith.select %1, %c1_i32, %c16_i32 : i32
    %3 = vector.broadcast %2 : i32 to vector<1x256xi32>
    %4 = arith.remsi %0, %3 : vector<1x256xi32>
    %c0_i32_0 = arith.constant 0 : i32
    %5 = vector.broadcast %c0_i32_0 : i32 to vector<1x256xi32>
    %6 = arith.cmpi ne, %4, %5 : vector<1x256xi32>
    %c0_i32_1 = arith.constant 0 : i32
    %7 = vector.broadcast %c0_i32_1 : i32 to vector<1x256xi32>
    %8 = arith.cmpi slt, %4, %7 : vector<1x256xi32>
    %c0_i32_2 = arith.constant 0 : i32
    %9 = arith.cmpi slt, %2, %c0_i32_2 : i32
    %10 = vector.broadcast %9 : i1 to vector<1x256xi1>
    %11 = vector.broadcast %10 : vector<1x256xi1> to vector<1x256xi1>
    %12 = arith.xori %8, %11 : vector<1x256xi1>
    %13 = arith.andi %12, %6 : vector<1x256xi1>
    %14 = vector.broadcast %2 : i32 to vector<1x256xi32>
    %15 = arith.addi %4, %14 : vector<1x256xi32>
    %16 = arith.select %13, %15, %4 : vector<1x256xi1>, vector<1x256xi32>
    %c0_i32_3 = arith.constant 0 : i32
    %17 = vector.broadcast %c0_i32_3 : i32 to vector<1x256xi32>
    %18 = arith.cmpi sgt, %16, %17 : vector<1x256xi32>
    %19 = arith.extui %18 : vector<1x256xi1> to vector<1x256xi32>
    %20 = arith.sitofp %19 : vector<1x256xi32> to vector<1x256xf32>
    %c15_i32 = arith.constant 15 : i32
    %21 = vector.broadcast %c15_i32 : i32 to vector<1x256xi32>
    %22 = arith.cmpi slt, %16, %21 : vector<1x256xi32>
    %23 = arith.extui %22 : vector<1x256xi1> to vector<1x256xi32>
    %24 = arith.sitofp %23 : vector<1x256xi32> to vector<1x256xf32>
    %c0 = arith.constant 0 : index
    %c0_4 = arith.constant 0 : index
    %c0_5 = arith.constant 0 : index
    %25 = vector.load %arg1[%c0, %c0_4, %c0_5] : memref<1x8x290xf32, #tpu.memory_space<vmem>>, vector<1x8x256xf32>
    %26 = vector.shape_cast %25 : vector<1x8x256xf32> to vector<8x256xf32>
    %27 = vector.broadcast %20 : vector<1x256xf32> to vector<8x256xf32>
    %28 = arith.mulf %26, %27 : vector<8x256xf32>
    %c0_6 = arith.constant 0 : index
    %c0_7 = arith.constant 0 : index
    %29 = vector.load %arg8[%c0_6, %c0_7] : memref<72x256xf32, #tpu.memory_space<vmem>>, vector<8x256xf32>
    tpu.vector_store %arg8[%c0_6, %c0_7], %28 {strides = array<i32>} : memref<72x256xf32, #tpu.memory_space<vmem>>, vector<8x256xf32>,
    %c0_8 = arith.constant 0 : index
    %c0_9 = arith.constant 0 : index
    %c1 = arith.constant 1 : index
    %30 = vector.load %arg1[%c0_8, %c0_9, %c1] : memref<1x8x290xf32, #tpu.memory_space<vmem>>, vector<1x8x256xf32>
    %31 = vector.shape_cast %30 : vector<1x8x256xf32> to vector<8x256xf32>
    %c8 = arith.constant 8 : index
    %c0_10 = arith.constant 0 : index
    %32 = vector.load %arg8[%c8, %c0_10] : memref<72x256xf32, #tpu.memory_space<vmem>>, vector<8x256xf32>
    tpu.vector_store %arg8[%c8, %c0_10], %31 {strides = array<i32>} : memref<72x256xf32, #tpu.memory_space<vmem>>, vector<8x256xf32>,
    %c0_11 = arith.constant 0 : index
    %c0_12 = arith.constant 0 : index
    %c2 = arith.constant 2 : index
    %33 = vector.load %arg1[%c0_11, %c0_12, %c2] : memref<1x8x290xf32, #tpu.memory_space<vmem>>, vector<1x8x256xf32>
    %34 = vector.shape_cast %33 : vector<1x8x256xf32> to vector<8x256xf32>
    %35 = vector.broadcast %24 : vector<1x256xf32> to vector<8x256xf32>
    %36 = arith.mulf %34, %35 : vector<8x256xf32>
    %c16 = arith.constant 16 : index
    %c0_13 = arith.constant 0 : index
    %37 = vector.load %arg8[%c16, %c0_13] : memref<72x256xf32, #tpu.memory_space<vmem>>, vector<8x256xf32>
    tpu.vector_store %arg8[%c16, %c0_13], %36 {strides = array<i32>} : memref<72x256xf32, #tpu.memory_space<vmem>>, vector<8x256xf32>,
    %c0_14 = arith.constant 0 : index
    %c0_15 = arith.constant 0 : index
    %c16_16 = arith.constant 16 : index
    %38 = vector.load %arg1[%c0_14, %c0_15, %c16_16] : memref<1x8x290xf32, #tpu.memory_space<vmem>>, vector<1x8x256xf32>
    %39 = vector.shape_cast %38 : vector<1x8x256xf32> to vector<8x256xf32>
    %40 = vector.broadcast %20 : vector<1x256xf32> to vector<8x256xf32>
    %41 = arith.mulf %39, %40 : vector<8x256xf32>
    %c24 = arith.constant 24 : index
    %c0_17 = arith.constant 0 : index
    %42 = vector.load %arg8[%c24, %c0_17] : memref<72x256xf32, #tpu.memory_space<vmem>>, vector<8x256xf32>
    tpu.vector_store %arg8[%c24, %c0_17], %41 {strides = array<i32>} : memref<72x256xf32, #tpu.memory_space<vmem>>, vector<8x256xf32>,
    %c0_18 = arith.constant 0 : index
    %c0_19 = arith.constant 0 : index
    %c17 = arith.constant 17 : index
    %43 = vector.load %arg1[%c0_18, %c0_19, %c17] : memref<1x8x290xf32, #tpu.memory_space<vmem>>, vector<1x8x256xf32>
    %44 = vector.shape_cast %43 : vector<1x8x256xf32> to vector<8x256xf32>
    %c32 = arith.constant 32 : index
    %c0_20 = arith.constant 0 : index
    %45 = vector.load %arg8[%c32, %c0_20] : memref<72x256xf32, #tpu.memory_space<vmem>>, vector<8x256xf32>
    tpu.vector_store %arg8[%c32, %c0_20], %44 {strides = array<i32>} : memref<72x256xf32, #tpu.memory_space<vmem>>, vector<8x256xf32>,
    %c0_21 = arith.constant 0 : index
    %c0_22 = arith.constant 0 : index
    %c18 = arith.constant 18 : index
    %46 = vector.load %arg1[%c0_21, %c0_22, %c18] : memref<1x8x290xf32, #tpu.memory_space<vmem>>, vector<1x8x256xf32>
    %47 = vector.shape_cast %46 : vector<1x8x256xf32> to vector<8x256xf32>
    %48 = vector.broadcast %24 : vector<1x256xf32> to vector<8x256xf32>
    %49 = arith.mulf %47, %48 : vector<8x256xf32>
    %c40 = arith.constant 40 : index
    %c0_23 = arith.constant 0 : index
    %50 = vector.load %arg8[%c40, %c0_23] : memref<72x256xf32, #tpu.memory_space<vmem>>, vector<8x256xf32>
    tpu.vector_store %arg8[%c40, %c0_23], %49 {strides = array<i32>} : memref<72x256xf32, #tpu.memory_space<vmem>>, vector<8x256xf32>,
    %c0_24 = arith.constant 0 : index
    %c0_25 = arith.constant 0 : index
    %c32_26 = arith.constant 32 : index
    %51 = vector.load %arg1[%c0_24, %c0_25, %c32_26] : memref<1x8x290xf32, #tpu.memory_space<vmem>>, vector<1x8x256xf32>
    %52 = vector.shape_cast %51 : vector<1x8x256xf32> to vector<8x256xf32>
    %53 = vector.broadcast %20 : vector<1x256xf32> to vector<8x256xf32>
    %54 = arith.mulf %52, %53 : vector<8x256xf32>
    %c48 = arith.constant 48 : index
    %c0_27 = arith.constant 0 : index
    %55 = vector.load %arg8[%c48, %c0_27] : memref<72x256xf32, #tpu.memory_space<vmem>>, vector<8x256xf32>
    tpu.vector_store %arg8[%c48, %c0_27], %54 {strides = array<i32>} : memref<72x256xf32, #tpu.memory_space<vmem>>, vector<8x256xf32>,
    %c0_28 = arith.constant 0 : index
    %c0_29 = arith.constant 0 : index
    %c33 = arith.constant 33 : index
    %56 = vector.load %arg1[%c0_28, %c0_29, %c33] : memref<1x8x290xf32, #tpu.memory_space<vmem>>, vector<1x8x256xf32>
    %57 = vector.shape_cast %56 : vector<1x8x256xf32> to vector<8x256xf32>
    %c56 = arith.constant 56 : index
    %c0_30 = arith.constant 0 : index
    %58 = vector.load %arg8[%c56, %c0_30] : memref<72x256xf32, #tpu.memory_space<vmem>>, vector<8x256xf32>
    tpu.vector_store %arg8[%c56, %c0_30], %57 {strides = array<i32>} : memref<72x256xf32, #tpu.memory_space<vmem>>, vector<8x256xf32>,
    %c0_31 = arith.constant 0 : index
    %c0_32 = arith.constant 0 : index
    %c34 = arith.constant 34 : index
    %59 = vector.load %arg1[%c0_31, %c0_32, %c34] : memref<1x8x290xf32, #tpu.memory_space<vmem>>, vector<1x8x256xf32>
    %60 = vector.shape_cast %59 : vector<1x8x256xf32> to vector<8x256xf32>
    %61 = vector.broadcast %24 : vector<1x256xf32> to vector<8x256xf32>
    %62 = arith.mulf %60, %61 : vector<8x256xf32>
    %c64 = arith.constant 64 : index
    %c0_33 = arith.constant 0 : index
    %63 = vector.load %arg8[%c64, %c0_33] : memref<72x256xf32, #tpu.memory_space<vmem>>, vector<8x256xf32>
    tpu.vector_store %arg8[%c64, %c0_33], %62 {strides = array<i32>} : memref<72x256xf32, #tpu.memory_space<vmem>>, vector<8x256xf32>,
    %c0_34 = arith.constant 0 : index
    %c0_35 = arith.constant 0 : index
    %64 = vector.load %arg4[%c0_34, %c0_35] : memref<24x14xf32, #tpu.memory_space<vmem>>, vector<24x1xf32>
    %c0_36 = arith.constant 0 : index
    %c0_37 = arith.constant 0 : index
    %65 = vector.load %arg2[%c0_36, %c0_37] : memref<24x72xf32, #tpu.memory_space<vmem>>, vector<24x72xf32>
    %c0_38 = arith.constant 0 : index
    %c0_39 = arith.constant 0 : index
    %66 = vector.load %arg8[%c0_38, %c0_39] : memref<72x256xf32, #tpu.memory_space<vmem>>, vector<72x256xf32>
    %cst = arith.constant dense<0.000000e+00> : vector<24x256xf32>
    %67 = tpu.matmul %65, %66, %cst {dimension_numbers = #tpu.dot_dimension_numbers<[1], [0], [0], [1], [0, 0, 1, 1], [], []>} : vector<24x72xf32>, vector<72x256xf32>, vector<24x256xf32> -> vector<24x256xf32>
    %68 = vector.broadcast %64 : vector<24x1xf32> to vector<24x256xf32>
    %69 = arith.addf %67, %68 : vector<24x256xf32>
    %70 = math.absf %69 : vector<24x256xf32>
    %cst_40 = arith.constant 0.000000e+00 : f32
    %71 = vector.broadcast %cst_40 : f32 to vector<24x256xf32>
    %72 = arith.subf %71, %70 : vector<24x256xf32>
    %73 = math.exp %72 : vector<24x256xf32>
    %cst_41 = arith.constant 1.000000e+00 : f32
    %74 = vector.broadcast %cst_41 : f32 to vector<24x256xf32>
    %75 = arith.addf %74, %73 : vector<24x256xf32>
    %cst_42 = arith.constant 1.000000e+00 : f32
    %76 = vector.broadcast %cst_42 : f32 to vector<24x256xf32>
    %77 = arith.divf %76, %75 : vector<24x256xf32>
    %cst_43 = arith.constant 0.000000e+00 : f32
    %78 = vector.broadcast %cst_43 : f32 to vector<24x256xf32>
    %79 = arith.cmpf oge, %69, %78 : vector<24x256xf32>
    %cst_44 = arith.constant 1.000000e+00 : f32
    %80 = vector.broadcast %cst_44 : f32 to vector<24x256xf32>
    %81 = arith.subf %80, %77 : vector<24x256xf32>
    %82 = arith.select %79, %77, %81 : vector<24x256xi1>, vector<24x256xf32>
    %83 = arith.mulf %69, %82 : vector<24x256xf32>
    %cst_45 = arith.constant 0.000000e+00 : f32
    %84 = vector.broadcast %cst_45 : f32 to vector<24x17xf32>
    %c0_46 = arith.constant 0 : index
    %c0_47 = arith.constant 0 : index
    %85 = vector.load %arg9[%c0_46, %c0_47] : memref<24x290xf32, #tpu.memory_space<vmem>>, vector<24x17xf32>
    tpu.vector_store %arg9[%c0_46, %c0_47], %84 {strides = array<i32>} : memref<24x290xf32, #tpu.memory_space<vmem>>, vector<24x17xf32>,
    %cst_48 = arith.constant 0.000000e+00 : f32
    %86 = vector.broadcast %cst_48 : f32 to vector<24x17xf32>
    %c0_49 = arith.constant 0 : index
    %c273 = arith.constant 273 : index
    %87 = vector.load %arg9[%c0_49, %c273] : memref<24x290xf32, #tpu.memory_space<vmem>>, vector<24x17xf32>
    tpu.vector_store %arg9[%c0_49, %c273], %86 {strides = array<i32>} : memref<24x290xf32, #tpu.memory_space<vmem>>, vector<24x17xf32>,
    %c0_50 = arith.constant 0 : index
    %c17_51 = arith.constant 17 : index
    %88 = vector.load %arg9[%c0_50, %c17_51] : memref<24x290xf32, #tpu.memory_space<vmem>>, vector<24x256xf32>
    tpu.vector_store %arg9[%c0_50, %c17_51], %83 {strides = array<i32>} : memref<24x290xf32, #tpu.memory_space<vmem>>, vector<24x256xf32>,
    %c0_52 = arith.constant 0 : index
    %c1_53 = arith.constant 1 : index
    %89 = vector.load %arg4[%c0_52, %c1_53] : memref<24x14xf32, #tpu.memory_space<vmem>>, vector<24x1xf32>
    %cst_54 = arith.constant 0.000000e+00 : f32
    %90 = vector.broadcast %cst_54 : f32 to vector<24x256xf32>
    %cst_55 = arith.constant 0.000000e+00 : f32
    %91 = vector.broadcast %cst_55 : f32 to vector<24x256xf32>
    %c0_56 = arith.constant 0 : index
    %c3 = arith.constant 3 : index
    %92 = vector.load %arg4[%c0_56, %c3] : memref<24x14xf32, #tpu.memory_space<vmem>>, vector<24x1xf32>
    %c0_57 = arith.constant 0 : index
    %c0_58 = arith.constant 0 : index
    %93 = vector.load %arg9[%c0_57, %c0_58] : memref<24x290xf32, #tpu.memory_space<vmem>>, vector<24x256xf32>
    %94 = vector.broadcast %92 : vector<24x1xf32> to vector<24x256xf32>
    %95 = arith.mulf %94, %93 : vector<24x256xf32>
    %96 = arith.addf %91, %95 : vector<24x256xf32>
    %c0_59 = arith.constant 0 : index
    %c6 = arith.constant 6 : index
    %97 = vector.load %arg4[%c0_59, %c6] : memref<24x14xf32, #tpu.memory_space<vmem>>, vector<24x1xf32>
    %c0_60 = arith.constant 0 : index
    %c16_61 = arith.constant 16 : index
    %98 = vector.load %arg9[%c0_60, %c16_61] : memref<24x290xf32, #tpu.memory_space<vmem>>, vector<24x256xf32>
    %99 = vector.broadcast %97 : vector<24x1xf32> to vector<24x256xf32>
    %100 = arith.mulf %99, %98 : vector<24x256xf32>
    %101 = arith.addf %96, %100 : vector<24x256xf32>
    %c0_62 = arith.constant 0 : index
    %c9 = arith.constant 9 : index
    %102 = vector.load %arg4[%c0_62, %c9] : memref<24x14xf32, #tpu.memory_space<vmem>>, vector<24x1xf32>
    %c0_63 = arith.constant 0 : index
    %c32_64 = arith.constant 32 : index
    %103 = vector.load %arg9[%c0_63, %c32_64] : memref<24x290xf32, #tpu.memory_space<vmem>>, vector<24x256xf32>
    %104 = vector.broadcast %102 : vector<24x1xf32> to vector<24x256xf32>
    %105 = arith.mulf %104, %103 : vector<24x256xf32>
    %106 = arith.addf %101, %105 : vector<24x256xf32>
    %107 = vector.broadcast %20 : vector<1x256xf32> to vector<24x256xf32>
    %108 = arith.mulf %106, %107 : vector<24x256xf32>
    %109 = arith.addf %90, %108 : vector<24x256xf32>
    %cst_65 = arith.constant 0.000000e+00 : f32
    %110 = vector.broadcast %cst_65 : f32 to vector<24x256xf32>
    %c0_66 = arith.constant 0 : index
    %c4 = arith.constant 4 : index
    %111 = vector.load %arg4[%c0_66, %c4] : memref<24x14xf32, #tpu.memory_space<vmem>>, vector<24x1xf32>
    %c0_67 = arith.constant 0 : index
    %c1_68 = arith.constant 1 : index
    %112 = vector.load %arg9[%c0_67, %c1_68] : memref<24x290xf32, #tpu.memory_space<vmem>>, vector<24x256xf32>
    %113 = vector.broadcast %111 : vector<24x1xf32> to vector<24x256xf32>
    %114 = arith.mulf %113, %112 : vector<24x256xf32>
    %115 = arith.addf %110, %114 : vector<24x256xf32>
    %c0_69 = arith.constant 0 : index
    %c7 = arith.constant 7 : index
    %116 = vector.load %arg4[%c0_69, %c7] : memref<24x14xf32, #tpu.memory_space<vmem>>, vector<24x1xf32>
    %c0_70 = arith.constant 0 : index
    %c17_71 = arith.constant 17 : index
    %117 = vector.load %arg9[%c0_70, %c17_71] : memref<24x290xf32, #tpu.memory_space<vmem>>, vector<24x256xf32>
    %118 = vector.broadcast %116 : vector<24x1xf32> to vector<24x256xf32>
    %119 = arith.mulf %118, %117 : vector<24x256xf32>
    %120 = arith.addf %115, %119 : vector<24x256xf32>
    %c0_72 = arith.constant 0 : index
    %c10 = arith.constant 10 : index
    %121 = vector.load %arg4[%c0_72, %c10] : memref<24x14xf32, #tpu.memory_space<vmem>>, vector<24x1xf32>
    %c0_73 = arith.constant 0 : index
    %c33_74 = arith.constant 33 : index
    %122 = vector.load %arg9[%c0_73, %c33_74] : memref<24x290xf32, #tpu.memory_space<vmem>>, vector<24x256xf32>
    %123 = vector.broadcast %121 : vector<24x1xf32> to vector<24x256xf32>
    %124 = arith.mulf %123, %122 : vector<24x256xf32>
    %125 = arith.addf %120, %124 : vector<24x256xf32>
    %126 = arith.addf %109, %125 : vector<24x256xf32>
    %cst_75 = arith.constant 0.000000e+00 : f32
    %127 = vector.broadcast %cst_75 : f32 to vector<24x256xf32>
    %c0_76 = arith.constant 0 : index
    %c5 = arith.constant 5 : index
    %128 = vector.load %arg4[%c0_76, %c5] : memref<24x14xf32, #tpu.memory_space<vmem>>, vector<24x1xf32>
    %c0_77 = arith.constant 0 : index
    %c2_78 = arith.constant 2 : index
    %129 = vector.load %arg9[%c0_77, %c2_78] : memref<24x290xf32, #tpu.memory_space<vmem>>, vector<24x256xf32>
    %130 = vector.broadcast %128 : vector<24x1xf32> to vector<24x256xf32>
    %131 = arith.mulf %130, %129 : vector<24x256xf32>
    %132 = arith.addf %127, %131 : vector<24x256xf32>
    %c0_79 = arith.constant 0 : index
    %c8_80 = arith.constant 8 : index
    %133 = vector.load %arg4[%c0_79, %c8_80] : memref<24x14xf32, #tpu.memory_space<vmem>>, vector<24x1xf32>
    %c0_81 = arith.constant 0 : index
    %c18_82 = arith.constant 18 : index
    %134 = vector.load %arg9[%c0_81, %c18_82] : memref<24x290xf32, #tpu.memory_space<vmem>>, vector<24x256xf32>
    %135 = vector.broadcast %133 : vector<24x1xf32> to vector<24x256xf32>
    %136 = arith.mulf %135, %134 : vector<24x256xf32>
    %137 = arith.addf %132, %136 : vector<24x256xf32>
    %c0_83 = arith.constant 0 : index
    %c11 = arith.constant 11 : index
    %138 = vector.load %arg4[%c0_83, %c11] : memref<24x14xf32, #tpu.memory_space<vmem>>, vector<24x1xf32>
    %c0_84 = arith.constant 0 : index
    %c34_85 = arith.constant 34 : index
    %139 = vector.load %arg9[%c0_84, %c34_85] : memref<24x290xf32, #tpu.memory_space<vmem>>, vector<24x256xf32>
    %140 = vector.broadcast %138 : vector<24x1xf32> to vector<24x256xf32>
    %141 = arith.mulf %140, %139 : vector<24x256xf32>
    %142 = arith.addf %137, %141 : vector<24x256xf32>
    %143 = vector.broadcast %24 : vector<1x256xf32> to vector<24x256xf32>
    %144 = arith.mulf %142, %143 : vector<24x256xf32>
    %145 = arith.addf %126, %144 : vector<24x256xf32>
    %146 = vector.broadcast %89 : vector<24x1xf32> to vector<24x256xf32>
    %147 = arith.addf %145, %146 : vector<24x256xf32>
    %148 = math.absf %147 : vector<24x256xf32>
    %cst_86 = arith.constant 0.000000e+00 : f32
    %149 = vector.broadcast %cst_86 : f32 to vector<24x256xf32>
    %150 = arith.subf %149, %148 : vector<24x256xf32>
    %151 = math.exp %150 : vector<24x256xf32>
    %cst_87 = arith.constant 1.000000e+00 : f32
    %152 = vector.broadcast %cst_87 : f32 to vector<24x256xf32>
    %153 = arith.addf %152, %151 : vector<24x256xf32>
    %cst_88 = arith.constant 1.000000e+00 : f32
    %154 = vector.broadcast %cst_88 : f32 to vector<24x256xf32>
    %155 = arith.divf %154, %153 : vector<24x256xf32>
    %cst_89 = arith.constant 0.000000e+00 : f32
    %156 = vector.broadcast %cst_89 : f32 to vector<24x256xf32>
    %157 = arith.cmpf oge, %147, %156 : vector<24x256xf32>
    %cst_90 = arith.constant 1.000000e+00 : f32
    %158 = vector.broadcast %cst_90 : f32 to vector<24x256xf32>
    %159 = arith.subf %158, %155 : vector<24x256xf32>
    %160 = arith.select %157, %155, %159 : vector<24x256xi1>, vector<24x256xf32>
    %161 = arith.mulf %147, %160 : vector<24x256xf32>
    %c0_91 = arith.constant 0 : index
    %c12 = arith.constant 12 : index
    %162 = vector.load %arg4[%c0_91, %c12] : memref<24x14xf32, #tpu.memory_space<vmem>>, vector<24x1xf32>
    %c0_92 = arith.constant 0 : index
    %c13 = arith.constant 13 : index
    %163 = vector.load %arg4[%c0_92, %c13] : memref<24x14xf32, #tpu.memory_space<vmem>>, vector<24x1xf32>
    %c0_93 = arith.constant 0 : index
    %c2_94 = arith.constant 2 : index
    %164 = vector.load %arg4[%c0_93, %c2_94] : memref<24x14xf32, #tpu.memory_space<vmem>>, vector<24x1xf32>
    %cst_95 = arith.constant dense<0.000000e+00> : vector<24xf32>
    %165 = vector.multi_reduction <add>, %161, %cst_95 [1] : vector<24x256xf32> to vector<24xf32>
    %166 = vector.shape_cast %165 : vector<24xf32> to vector<24x1xf32>
    %cst_96 = arith.constant 3.906250e-03 : f32
    %167 = vector.broadcast %cst_96 : f32 to vector<24x1xf32>
    %168 = arith.mulf %166, %167 : vector<24x1xf32>
    %169 = arith.mulf %162, %168 : vector<24x1xf32>
    %cst_97 = arith.constant dense<0.000000e+00> : vector<1xf32>
    %170 = vector.multi_reduction <add>, %169, %cst_97 [0] : vector<24x1xf32> to vector<1xf32>
    %171 = vector.shape_cast %170 : vector<1xf32> to vector<1x1xf32>
    %c0_98 = arith.constant 0 : index
    %c0_99 = arith.constant 0 : index
    %172 = vector.load %arg5[%c0_98, %c0_99] : memref<1x1xf32, #tpu.memory_space<vmem>>, vector<1x1xf32>
    %173 = arith.addf %171, %172 : vector<1x1xf32>
    %174 = math.absf %173 : vector<1x1xf32>
    %cst_100 = arith.constant 0.000000e+00 : f32
    %175 = vector.broadcast %cst_100 : f32 to vector<1x1xf32>
    %176 = arith.subf %175, %174 : vector<1x1xf32>
    %177 = math.exp %176 : vector<1x1xf32>
    %cst_101 = arith.constant 1.000000e+00 : f32
    %178 = vector.broadcast %cst_101 : f32 to vector<1x1xf32>
    %179 = arith.addf %178, %177 : vector<1x1xf32>
    %cst_102 = arith.constant 1.000000e+00 : f32
    %180 = vector.broadcast %cst_102 : f32 to vector<1x1xf32>
    %181 = arith.divf %180, %179 : vector<1x1xf32>
    %cst_103 = arith.constant 0.000000e+00 : f32
    %182 = vector.broadcast %cst_103 : f32 to vector<1x1xf32>
    %183 = arith.cmpf oge, %173, %182 : vector<1x1xf32>
    %cst_104 = arith.constant 1.000000e+00 : f32
    %184 = vector.broadcast %cst_104 : f32 to vector<1x1xf32>
    %185 = arith.subf %184, %181 : vector<1x1xf32>
    %186 = arith.select %183, %181, %185 : vector<1x1xi1>, vector<1x1xf32>
    %187 = arith.mulf %173, %186 : vector<1x1xf32>
    %188 = vector.broadcast %187 : vector<1x1xf32> to vector<24x1xf32>
    %189 = arith.mulf %163, %188 : vector<24x1xf32>
    %cst_105 = arith.constant dense<0.000000e+00> : vector<24xf32>
    %190 = vector.multi_reduction <add>, %189, %cst_105 [1] : vector<24x1xf32> to vector<24xf32>
    %191 = vector.shape_cast %190 : vector<24xf32> to vector<24x1xf32>
    %192 = arith.addf %191, %164 : vector<24x1xf32>
    %193 = math.absf %192 : vector<24x1xf32>
    %cst_106 = arith.constant 0.000000e+00 : f32
    %194 = vector.broadcast %cst_106 : f32 to vector<24x1xf32>
    %195 = arith.subf %194, %193 : vector<24x1xf32>
    %196 = math.exp %195 : vector<24x1xf32>
    %cst_107 = arith.constant 1.000000e+00 : f32
    %197 = vector.broadcast %cst_107 : f32 to vector<24x1xf32>
    %198 = arith.addf %197, %196 : vector<24x1xf32>
    %cst_108 = arith.constant 1.000000e+00 : f32
    %199 = vector.broadcast %cst_108 : f32 to vector<24x1xf32>
    %200 = arith.divf %199, %198 : vector<24x1xf32>
    %cst_109 = arith.constant 0.000000e+00 : f32
    %201 = vector.broadcast %cst_109 : f32 to vector<24x1xf32>
    %202 = arith.cmpf oge, %192, %201 : vector<24x1xf32>
    %cst_110 = arith.constant 1.000000e+00 : f32
    %203 = vector.broadcast %cst_110 : f32 to vector<24x1xf32>
    %204 = arith.subf %203, %200 : vector<24x1xf32>
    %205 = arith.select %202, %200, %204 : vector<24x1xi1>, vector<24x1xf32>
    %206 = vector.broadcast %205 : vector<24x1xf32> to vector<24x256xf32>
    %207 = arith.mulf %161, %206 : vector<24x256xf32>
    %c0_111 = arith.constant 0 : index
    %c0_112 = arith.constant 0 : index
    %208 = vector.load %arg3[%c0_111, %c0_112] : memref<4x24xf32, #tpu.memory_space<vmem>>, vector<4x24xf32>
    %cst_113 = arith.constant dense<0.000000e+00> : vector<4x256xf32>
    %209 = tpu.matmul %208, %207, %cst_113 {dimension_numbers = #tpu.dot_dimension_numbers<[1], [0], [0], [1], [0, 0, 1, 1], [], []>} : vector<4x24xf32>, vector<24x256xf32>, vector<4x256xf32> -> vector<4x256xf32>
    %c0_114 = arith.constant 0 : index
    %c0_115 = arith.constant 0 : index
    %210 = vector.load %arg6[%c0_114, %c0_115] : memref<4x1xf32, #tpu.memory_space<vmem>>, vector<4x1xf32>
    %211 = vector.broadcast %210 : vector<4x1xf32> to vector<4x256xf32>
    %212 = arith.addf %209, %211 : vector<4x256xf32>
    %c0_116 = arith.constant 0 : index
    %c0_117 = arith.constant 0 : index
    %c17_118 = arith.constant 17 : index
    %213 = vector.load %arg1[%c0_116, %c0_117, %c17_118] : memref<1x8x290xf32, #tpu.memory_space<vmem>>, vector<1x4x256xf32>
    %214 = vector.shape_cast %213 : vector<1x4x256xf32> to vector<4x256xf32>
    %215 = arith.addf %212, %214 : vector<4x256xf32>
    %c0_119 = arith.constant 0 : index
    %c0_120 = arith.constant 0 : index
    %c0_121 = arith.constant 0 : index
    %216 = vector.load %arg7[%c0_119, %c0_120, %c0_121] : memref<1x4x256xf32, #tpu.memory_space<vmem>>, vector<1x4x256xf32>
    %217 = vector.shape_cast %216 : vector<1x4x256xf32> to vector<4x256xf32>
    %218 = vector.shape_cast %215 : vector<4x256xf32> to vector<1x4x256xf32>
    tpu.vector_store %arg7[%c0_119, %c0_120, %c0_121], %218 {strides = array<i32>} : memref<1x4x256xf32, #tpu.memory_space<vmem>>, vector<1x4x256xf32>,
    return
  }
  func.func @transform_0(%arg0: i32) -> (i32, i32, i32) {
    %c0_i32 = arith.constant 0 : i32
    %c0_i32_0 = arith.constant 0 : i32
    %c0_i32_1 = arith.constant 0 : i32
    return %arg0, %c0_i32, %c0_i32_0 : i32, i32, i32
  }
  func.func @transform_1(%arg0: i32) -> (i32, i32) {
    %c0_i32 = arith.constant 0 : i32
    %c0_i32_0 = arith.constant 0 : i32
    %c0_i32_1 = arith.constant 0 : i32
    return %c0_i32, %c0_i32_0 : i32, i32
  }
  func.func @transform_2(%arg0: i32) -> (i32, i32) {
    %c0_i32 = arith.constant 0 : i32
    %c0_i32_0 = arith.constant 0 : i32
    %c0_i32_1 = arith.constant 0 : i32
    return %c0_i32, %c0_i32_0 : i32, i32
  }
  func.func @transform_3(%arg0: i32) -> (i32, i32) {
    %c0_i32 = arith.constant 0 : i32
    %c0_i32_0 = arith.constant 0 : i32
    %c0_i32_1 = arith.constant 0 : i32
    return %c0_i32, %c0_i32_0 : i32, i32
  }
  func.func @transform_4(%arg0: i32) -> (i32, i32) {
    %c0_i32 = arith.constant 0 : i32
    %c0_i32_0 = arith.constant 0 : i32
    %c0_i32_1 = arith.constant 0 : i32
    return %c0_i32, %c0_i32_0 : i32, i32
  }
  func.func @transform_5(%arg0: i32) -> (i32, i32) {
    %c0_i32 = arith.constant 0 : i32
    %c0_i32_0 = arith.constant 0 : i32
    %c0_i32_1 = arith.constant 0 : i32
    return %c0_i32, %c0_i32_0 : i32, i32
  }
  func.func @transform_6(%arg0: i32) -> (i32, i32, i32) {
    %c0_i32 = arith.constant 0 : i32
    %c0_i32_0 = arith.constant 0 : i32
    %c0_i32_1 = arith.constant 0 : i32
    return %arg0, %c0_i32, %c0_i32_0 : i32, i32, i32
  }
}

</mosaic_0001>

<llo_original>
// kernel: inverted_residual_forward.1
$region0: #{inverted_residual_forward.1}
  #allocation0 [shape = 'u32[]', space=smem, size = 0x4, offset = 0x4, fixed_abs, tag = 'smem constant byte address 0x4 - core index']
  #allocation1 [shape = 'u32[144,128]{1,0:T(1,128)}', space=vmem, size = 0x12000, scoped, tag = 'internal scratch']
  #allocation2 [shape = 'f32[72,256]{1,0:T(8,128)}', space=vmem, size = 0x12000, scoped, tag = 'scratch operand']
  #allocation3 [shape = 'f32[24,290]{1,0:T(8,128)}', space=vmem, size = 0x9000, scoped, tag = 'scratch operand']
  #allocation4 [shape = 'f32[1,1]{1,0:T(1,128)S(1)}', space=vmem, size = 0x200, scoped, tag = 'scoped memory for inverted_residual_forward.1']
  %s0 = inlined_call_operand.vmem [shape: f32[2,8,290], index: 0, kind: input, shape index: {}]
  %s1 = inlined_call_operand.vmem [shape: f32[24,72], index: 1, kind: input, shape index: {}]
  %s2 = inlined_call_operand.vmem [shape: f32[4,24], index: 2, kind: input, shape index: {}]
  %s3 = inlined_call_operand.vmem [shape: f32[24,14], index: 3, kind: input, shape index: {}]
  %s4 = inlined_call_operand.<no memory space> [shape: f32[1,1], index: 4, kind: input, shape index: {}]
  %s5 = inlined_call_operand.vmem [shape: f32[4,1], index: 5, kind: input, shape index: {}]
  %s6 = inlined_call_operand.vmem [shape: f32[2,4,256], index: 6, kind: output, shape index: {}]
  %s7 = sld [smem:[#allocation0]]
  $region57: #{inverted_residual_forward.1} parent=0
    _
  %s9 = ssub.s32 1, %s7
  %s10 = scalar_select 0, %s9, %s7
  %v11 = vstv %s4
  %12 = vst [vmem:[#allocation4] sm:$0x1] %v11
  loop: start=0, step=1, limit=4
  $region2: #{inverted_residual_forward.1} parent=0 // loop_pre_header
    _
  $region3: #{inverted_residual_forward.1} parent=0 // loop_header
    %s14 = sphi 0, %s18
    %p15 = scmp.ge.s32.totalorder %s14, 4
    %s24 = sphi 0, %s26
    %s27 = sphi 0, %s24
    %s28 = sphi 0, %s27
    %s44 = sphi 0, %s28
    %s48 = sphi 0, %s48
    %s50 = sphi 0, %s48
    %s51 = sphi 0, %s50
    %s65 = sphi 0, %s51
    %s69 = sphi 0, %s69
    %s71 = sphi 0, %s69
    %s72 = sphi 0, %s71
    %s86 = sphi 0, %s72
    %s90 = sphi 0, %s90
    %s92 = sphi 0, %s90
    %s93 = sphi 0, %s92
    %s107 = sphi 0, %s93
    %s111 = sphi 0, %s111
    %s113 = sphi 0, %s111
    %s114 = sphi 0, %s113
    %s128 = sphi 0, %s114
    %s132 = sphi 0, %s132
    %s134 = sphi 0, %s132
    %s135 = sphi 0, %s134
    %s149 = sphi 0, %s135
    %s155 = sphi 0, %s157
    %s158 = sphi 0, %s155
    %s159 = sphi 0, %s158
    %s175 = sphi 0, %s159
  $region4: #{inverted_residual_forward.1} parent=0 // loop_header_branch
    %17 = sbr.rel (%p15) target = $region8
  $region5: #{inverted_residual_forward.1} parent=0 // loop_body
    %s19 = ssub.s32 %s14, 1
    %s20 = ssub.s32 %s14, 2
    %s21 = sadd.s32 %s14, 1
    %s22 = ssub.s32 %s14, %s21
    %p23 = scmp.eq.s32.totalorder %s22, 0
    %s25 = sadd.s32 %s24, 1
    %s26 = scalar_select %p23, %s24, %s25
    %p29 = pneg %p23
    %p30 = scmp.eq.s32.totalorder %s14, 1
    %p31 = por %p29, %p30
    %p32 = scmp.ne.s32.totalorder %s24, %s27
    %p33 = scmp.eq.s32.totalorder %s14, 0
    %p34 = por %p32, %p33
    %p35 = scmp.ne.s32.totalorder %s24, %s27
    %p36 = scmp.eq.s32.totalorder %s19, 1
    %p37 = por %p35, %p36
    %p38 = scmp.ne.s32.totalorder %s27, %s28
    %p39 = scmp.eq.s32.totalorder %s19, 0
    %p40 = por %p38, %p39
    %p41 = scmp.ne.s32.totalorder %s27, %s28
    %p42 = scmp.eq.s32.totalorder %s20, 1
    %p43 = por %p41, %p42
    %p45 = scmp.ne.s32.totalorder %s28, %s44
    %p46 = scmp.eq.s32.totalorder %s20, 0
    %p47 = por %p45, %p46
    %s49 = sadd.s32 %s48, 1
    %p52 = scmp.eq.s32.totalorder %s14, 1
    %p53 = scmp.ne.s32.totalorder %s48, %s50
    %p54 = scmp.eq.s32.totalorder %s14, 0
    %p55 = por %p53, %p54
    %p56 = scmp.ne.s32.totalorder %s48, %s50
    %p57 = scmp.eq.s32.totalorder %s19, 1
    %p58 = por %p56, %p57
    %p59 = scmp.ne.s32.totalorder %s50, %s51
    %p60 = scmp.eq.s32.totalorder %s19, 0
    %p61 = por %p59, %p60
    %p62 = scmp.ne.s32.totalorder %s50, %s51
    %p63 = scmp.eq.s32.totalorder %s20, 1
    %p64 = por %p62, %p63
    %p66 = scmp.ne.s32.totalorder %s51, %s65
    %p67 = scmp.eq.s32.totalorder %s20, 0
    %p68 = por %p66, %p67
    %s70 = sadd.s32 %s69, 1
    %p73 = scmp.eq.s32.totalorder %s14, 1
    %p74 = scmp.ne.s32.totalorder %s69, %s71
    %p75 = scmp.eq.s32.totalorder %s14, 0
    %p76 = por %p74, %p75
    %p77 = scmp.ne.s32.totalorder %s69, %s71
    %p78 = scmp.eq.s32.totalorder %s19, 1
    %p79 = por %p77, %p78
    %p80 = scmp.ne.s32.totalorder %s71, %s72
    %p81 = scmp.eq.s32.totalorder %s19, 0
    %p82 = por %p80, %p81
    %p83 = scmp.ne.s32.totalorder %s71, %s72
    %p84 = scmp.eq.s32.totalorder %s20, 1
    %p85 = por %p83, %p84
    %p87 = scmp.ne.s32.totalorder %s72, %s86
    %p88 = scmp.eq.s32.totalorder %s20, 0
    %p89 = por %p87, %p88
    %s91 = sadd.s32 %s90, 1
    %p94 = scmp.eq.s32.totalorder %s14, 1
    %p95 = scmp.ne.s32.totalorder %s90, %s92
    %p96 = scmp.eq.s32.totalorder %s14, 0
    %p97 = por %p95, %p96
    %p98 = scmp.ne.s32.totalorder %s90, %s92
    %p99 = scmp.eq.s32.totalorder %s19, 1
    %p100 = por %p98, %p99
    %p101 = scmp.ne.s32.totalorder %s92, %s93
    %p102 = scmp.eq.s32.totalorder %s19, 0
    %p103 = por %p101, %p102
    %p104 = scmp.ne.s32.totalorder %s92, %s93
    %p105 = scmp.eq.s32.totalorder %s20, 1
    %p106 = por %p104, %p105
    %p108 = scmp.ne.s32.totalorder %s93, %s107
    %p109 = scmp.eq.s32.totalorder %s20, 0
    %p110 = por %p108, %p109
    %s112 = sadd.s32 %s111, 1
    %p115 = scmp.eq.s32.totalorder %s14, 1
    %p116 = scmp.ne.s32.totalorder %s111, %s113
    %p117 = scmp.eq.s32.totalorder %s14, 0
    %p118 = por %p116, %p117
    %p119 = scmp.ne.s32.totalorder %s111, %s113
    %p120 = scmp.eq.s32.totalorder %s19, 1
    %p121 = por %p119, %p120
    %p122 = scmp.ne.s32.totalorder %s113, %s114
    %p123 = scmp.eq.s32.totalorder %s19, 0
    %p124 = por %p122, %p123
    %p125 = scmp.ne.s32.totalorder %s113, %s114
    %p126 = scmp.eq.s32.totalorder %s20, 1
    %p127 = por %p125, %p126
    %p129 = scmp.ne.s32.totalorder %s114, %s128
    %p130 = scmp.eq.s32.totalorder %s20, 0
    %p131 = por %p129, %p130
    %s133 = sadd.s32 %s132, 1
    %p136 = scmp.eq.s32.totalorder %s14, 1
    %p137 = scmp.ne.s32.totalorder %s132, %s134
    %p138 = scmp.eq.s32.totalorder %s14, 0
    %p139 = por %p137, %p138
    %p140 = scmp.ne.s32.totalorder %s132, %s134
    %p141 = scmp.eq.s32.totalorder %s19, 1
    %p142 = por %p140, %p141
    %p143 = scmp.ne.s32.totalorder %s134, %s135
    %p144 = scmp.eq.s32.totalorder %s19, 0
    %p145 = por %p143, %p144
    %p146 = scmp.ne.s32.totalorder %s134, %s135
    %p147 = scmp.eq.s32.totalorder %s20, 1
    %p148 = por %p146, %p147
    %p150 = scmp.ne.s32.totalorder %s135, %s149
    %p151 = scmp.eq.s32.totalorder %s20, 0
    %p152 = por %p150, %p151
    %s153 = ssub.s32 %s14, %s21
    %p154 = scmp.eq.s32.totalorder %s153, 0
    %s156 = sadd.s32 %s155, 1
    %s157 = scalar_select %p154, %s155, %s156
    %p160 = pneg %p154
    %p161 = scmp.eq.s32.totalorder %s14, 1
    %p162 = por %p160, %p161
    %p163 = scmp.ne.s32.totalorder %s155, %s158
    %p164 = scmp.eq.s32.totalorder %s14, 0
    %p165 = por %p163, %p164
    %p166 = scmp.ne.s32.totalorder %s155, %s158
    %p167 = scmp.eq.s32.totalorder %s19, 1
    %p168 = por %p166, %p167
    %p169 = scmp.ne.s32.totalorder %s158, %s159
    %p170 = scmp.eq.s32.totalorder %s19, 0
    %p171 = por %p169, %p170
    %p172 = scmp.ne.s32.totalorder %s158, %s159
    %p173 = scmp.eq.s32.totalorder %s20, 1
    %p174 = por %p172, %p173
    %p176 = scmp.ne.s32.totalorder %s159, %s175
    %p177 = scmp.eq.s32.totalorder %s20, 0
    %p178 = por %p176, %p177
    %p179 = scmp.le.s32.totalorder 1, %s14
    %p180 = scmp.lt.s32.totalorder %s14, 3
    %p181 = pnand %p179, %p180
    %p182 = pneg %p181
    // Predicated region
    $region9: #{inverted_residual_forward.1} parent=5 // pred_check
      _
    $region10: #{inverted_residual_forward.1} parent=5 // pred_check_branch
      %184 = sbr.rel (%p181) target = $region12
    $region11: #{inverted_residual_forward.1} parent=5 // pred_region
      %s185 = ssub.s32 %s14, 1
      // Predicated region
      $region13: #{inverted_residual_forward.1} parent=11 // pred_check
        %p186 = pneg %p61
      $region14: #{inverted_residual_forward.1} parent=11 // pred_check_branch
        %188 = sbr.rel (%p186) target = $region16
      $region15: #{inverted_residual_forward.1} parent=11 // pred_region
        _
      $region16: #{inverted_residual_forward.1} parent=11 // pred_fallthru
        _
      // Predicated region
      $region17: #{inverted_residual_forward.1} parent=11 // pred_check
        %p189 = pneg %p82
      $region18: #{inverted_residual_forward.1} parent=11 // pred_check_branch
        %191 = sbr.rel (%p189) target = $region20
      $region19: #{inverted_residual_forward.1} parent=11 // pred_region
        _
      $region20: #{inverted_residual_forward.1} parent=11 // pred_fallthru
        _
      // Predicated region
      $region21: #{inverted_residual_forward.1} parent=11 // pred_check
        %p192 = pneg %p103
      $region22: #{inverted_residual_forward.1} parent=11 // pred_check_branch
        %194 = sbr.rel (%p192) target = $region24
      $region23: #{inverted_residual_forward.1} parent=11 // pred_region
        _
      $region24: #{inverted_residual_forward.1} parent=11 // pred_fallthru
        _
      // Predicated region
      $region25: #{inverted_residual_forward.1} parent=11 // pred_check
        %p195 = pneg %p124
      $region26: #{inverted_residual_forward.1} parent=11 // pred_check_branch
        %197 = sbr.rel (%p195) target = $region28
      $region27: #{inverted_residual_forward.1} parent=11 // pred_region
        _
      $region28: #{inverted_residual_forward.1} parent=11 // pred_fallthru
        _
      // Predicated region
      $region29: #{inverted_residual_forward.1} parent=11 // pred_check
        %p198 = pneg %p145
      $region30: #{inverted_residual_forward.1} parent=11 // pred_check_branch
        %200 = sbr.rel (%p198) target = $region32
      $region31: #{inverted_residual_forward.1} parent=11 // pred_region
        _
      $region32: #{inverted_residual_forward.1} parent=11 // pred_fallthru
        _
    $region12: #{inverted_residual_forward.1} parent=5 // pred_fallthru
      _
    %p201 = scmp.lt.s32.totalorder %s14, 2
    // Predicated region
    $region33: #{inverted_residual_forward.1} parent=5 // pred_check
      %p202 = pneg %p201
    $region34: #{inverted_residual_forward.1} parent=5 // pred_check_branch
      %204 = sbr.rel (%p202) target = $region36
    $region35: #{inverted_residual_forward.1} parent=5 // pred_region
      // Predicated region
      $region37: #{inverted_residual_forward.1} parent=35 // pred_check
        %p205 = pneg %p34
      $region38: #{inverted_residual_forward.1} parent=35 // pred_check_branch
        %207 = sbr.rel (%p205) target = $region40
      $region39: #{inverted_residual_forward.1} parent=35 // pred_region
        %p208 = scmp.lt.s32.totalorder %s14, 1
        %s209 = scalar_select %p208, %s14, 1
        %s210 = smul.addr %s209, 3
        %s211 = smul.addr %s210, 8
        %s212 = scalar_lea.vmem %s0, %s211
      $region40: #{inverted_residual_forward.1} parent=35 // pred_fallthru
        _
    $region36: #{inverted_residual_forward.1} parent=5 // pred_fallthru
      _
    %p213 = scmp.le.s32.totalorder 1, %s14
    %p214 = scmp.lt.s32.totalorder %s14, 3
    %p215 = pnand %p213, %p214
    %p216 = pneg %p215
    // Predicated region
    $region41: #{inverted_residual_forward.1} parent=5 // pred_check
      _
    $region42: #{inverted_residual_forward.1} parent=5 // pred_check_branch
      %218 = sbr.rel (%p215) target = $region44
    $region43: #{inverted_residual_forward.1} parent=5 // pred_region
      %s219 = ssub.s32 %s14, 1
      %p220 = scmp.lt.s32.totalorder %s19, 1
      %s221 = scalar_select %p220, %s19, 1
      %s222 = smul.addr %s221, 3
      %s223 = smul.addr %s222, 8
      %s224 = scalar_lea.vmem %s0, %s223
      %p225 = pneg %p40
      %p226 = pneg %p37
      %p227 = pneg %p61
      %p228 = pneg %p58
      %p229 = pneg %p82
      %p230 = pneg %p79
      %p231 = pneg %p103
      %p232 = pneg %p100
      %p233 = pneg %p124
      %p234 = pneg %p121
      %p235 = pneg %p145
      %p236 = pneg %p142
      %p237 = pneg %p171
      %p238 = pneg %p168
      %p239 = scmp.lt.s32.totalorder %s19, 1
      %s240 = scalar_select %p239, %s19, 1
      %s241 = smul.addr %s240, 2
      %s242 = smul.addr %s241, 4
      %s243 = scalar_lea.vmem %s6, %s242
      %p244 = scmp.lt.s32.totalorder %s19, 1
      %s245 = scalar_select %p244, %s19, 1
      %s246 = smul.addr %s245, 3
      %s247 = smul.addr %s246, 8
      %s248 = scalar_lea.vmem %s0, %s247
      %p249 = scmp.lt.s32.totalorder %s19, 1
      %s250 = scalar_select %p249, %s19, 1
      %s251 = smul.addr %s250, 2
      %s252 = smul.addr %s251, 4
      %s253 = scalar_lea.vmem %s6, %s252
      %v254 = vlaneseq
      %v255 = vand.u32 %v254, 127
      %v256 = vadd.s32 %v255, 128
      %vm257 = vcmp.lt.s32.totalorder %v255, 0
      %v258 = vsub.s32 0, %v255
      %v259 = vsel %vm257, %v258, %v255
      %v260 = vshrl.u32 %v259, 4
      %v261 = vand.u32 %v259, 15
      %v262 = vsub.s32 0, %v261
      %v263 = vsel %vm257, %v262, %v261
      %vm264 = vcmp.lt.s32.totalorder %v256, 0
      %v265 = vsub.s32 0, %v256
      %v266 = vsel %vm264, %v265, %v256
      %v267 = vshrl.u32 %v266, 4
      %v268 = vand.u32 %v266, 15
      %v269 = vsub.s32 0, %v268
      %v270 = vsel %vm264, %v269, %v268
      %vm271 = vcmp.ne.s32.totalorder %v263, 0
      %vm272 = vcmp.ne.s32.totalorder %v270, 0
      %vm273 = vcmp.lt.s32.totalorder %v263, 0
      %vm274 = vcmp.lt.s32.totalorder %v270, 0
      %vm275 = vmand %vm273, %vm271
      %vm276 = vmand %vm274, %vm272
      %v277 = vadd.s32 %v263, 16
      %v278 = vadd.s32 %v270, 16
      %v279 = vsel %vm275, %v277, %v263
      %v280 = vsel %vm276, %v278, %v270
      %vm281 = vcmp.gt.s32.totalorder %v279, 0
      %vm282 = vcmp.gt.s32.totalorder %v280, 0
      %v283 = vsel %vm281, 1, 0
      %v284 = vsel %vm282, 1, 0
      %v285 = vcvt.s32.f32 %v283
      %v286 = vcvt.s32.f32 %v284
      %vm287 = vcmp.lt.s32.totalorder %v279, 15
      %vm288 = vcmp.lt.s32.totalorder %v280, 15
      %v289 = vsel %vm287, 1, 0
      %v290 = vsel %vm288, 1, 0
      %v291 = vcvt.s32.f32 %v289
      %v292 = vcvt.s32.f32 %v290
      %v293 = vld [vmem:[%s248] sm:$0xff]
      %v294 = vld [vmem:[%s248 + $0x8] sm:$0xff]
      %v295 = vmul.f32 %v293, %v285
      %v296 = vmul.f32 %v294, %v286
      %297 = vst [vmem:[#allocation2] sm:$0xff] %v295
      %298 = vst [vmem:[#allocation2 + $0x8] sm:$0xff] %v296
      %v299 = vld [vmem:[%s248] sm:$0xff]
      %v300 = vld [vmem:[%s248 + $0x8] sm:$0xff]
      %v301 = vld [vmem:[%s248 + $0x10] sm:$0xff]
      %305 = vrot.lane.b32.xlu0 %v299, 127
      %v306 = vpop.permute.xlu0 %305
      %307 = vrot.lane.b32.xlu0 %v300, 127
      %v308 = vpop.permute.xlu0 %307
      %309 = vrot.lane.b32.xlu0 %v301, 127
      %v310 = vpop.permute.xlu0 %309
      %vm311 = vcmask 1039360
      %v312 = vsel %vm311, %v306, %v308
      %v313 = vsel %vm311, %v308, %v310
      %316 = vst [vmem:[#allocation2 + $0x10] sm:$0xff] %v312
      %317 = vst [vmem:[#allocation2 + $0x18] sm:$0xff] %v313
      %v318 = vld [vmem:[%s248] sm:$0xff]
      %v319 = vld [vmem:[%s248 + $0x8] sm:$0xff]
      %v320 = vld [vmem:[%s248 + $0x10] sm:$0xff]
      %323 = vrot.lane.b32.xlu0 %v291, 2
      %v324 = vpop.permute.xlu0 %323
      %325 = vrot.lane.b32.xlu0 %v292, 2
      %v326 = vpop.permute.xlu0 %325
      %vm327 = vcmask 15360
      %v328 = vsel %vm327, %v324, %v326
      %v332 = vmul.f32 %v318, %v324
      %v333 = vmul.f32 %v319, %v328
      %v334 = vmul.f32 %v320, %v326
      %338 = vrot.lane.b32.xlu0 %v332, 126
      %v339 = vpop.permute.xlu0 %338
      %340 = vrot.lane.b32.xlu0 %v333, 126
      %v341 = vpop.permute.xlu0 %340
      %342 = vrot.lane.b32.xlu0 %v334, 126
      %v343 = vpop.permute.xlu0 %342
      %vm344 = vcmask 1031168
      %v345 = vsel %vm344, %v339, %v341
      %v346 = vsel %vm344, %v341, %v343
      %349 = vst [vmem:[#allocation2 + $0x20] sm:$0xff] %v345
      %350 = vst [vmem:[#allocation2 + $0x28] sm:$0xff] %v346
      %v351 = vld [vmem:[%s248] sm:$0xff]
      %v352 = vld [vmem:[%s248 + $0x8] sm:$0xff]
      %v353 = vld [vmem:[%s248 + $0x10] sm:$0xff]
      %356 = vrot.lane.b32.xlu0 %v285, 16
      %v357 = vpop.permute.xlu0 %356
      %358 = vrot.lane.b32.xlu0 %v286, 16
      %v359 = vpop.permute.xlu0 %358
      %vm360 = vcmask 130048
      %v361 = vsel %vm360, %v357, %v359
      %v365 = vmul.f32 %v351, %v357
      %v366 = vmul.f32 %v352, %v361
      %v367 = vmul.f32 %v353, %v359
      %371 = vrot.lane.b32.xlu0 %v365, 112
      %v372 = vpop.permute.xlu0 %371
      %373 = vrot.lane.b32.xlu0 %v366, 112
      %v374 = vpop.permute.xlu0 %373
      %375 = vrot.lane.b32.xlu0 %v367, 112
      %v376 = vpop.permute.xlu0 %375
      %vm377 = vcmask 916480
      %v378 = vsel %vm377, %v372, %v374
      %v379 = vsel %vm377, %v374, %v376
      %382 = vst [vmem:[#allocation2 + $0x30] sm:$0xff] %v378
      %383 = vst [vmem:[#allocation2 + $0x38] sm:$0xff] %v379
      %v384 = vld [vmem:[%s248] sm:$0xff]
      %v385 = vld [vmem:[%s248 + $0x8] sm:$0xff]
      %v386 = vld [vmem:[%s248 + $0x10] sm:$0xff]
      %390 = vrot.lane.b32.xlu0 %v384, 111
      %v391 = vpop.permute.xlu0 %390
      %392 = vrot.lane.b32.xlu0 %v385, 111
      %v393 = vpop.permute.xlu0 %392
      %394 = vrot.lane.b32.xlu0 %v386, 111
      %v395 = vpop.permute.xlu0 %394
      %vm396 = vcmask 908288
      %v397 = vsel %vm396, %v391, %v393
      %v398 = vsel %vm396, %v393, %v395
      %401 = vst [vmem:[#allocation2 + $0x40] sm:$0xff] %v397
      %402 = vst [vmem:[#allocation2 + $0x48] sm:$0xff] %v398
      %v403 = vld [vmem:[%s248] sm:$0xff]
      %v404 = vld [vmem:[%s248 + $0x8] sm:$0xff]
      %v405 = vld [vmem:[%s248 + $0x10] sm:$0xff]
      %406 = vrot.lane.b32.xlu0 %v291, 18
      %v407 = vpop.permute.xlu0 %406
      %408 = vrot.lane.b32.xlu0 %v292, 18
      %v409 = vpop.permute.xlu0 %408
      %vm410 = vcmask 146432
      %v411 = vsel %vm410, %v407, %v409
      %v415 = vmul.f32 %v403, %v407
      %v416 = vmul.f32 %v404, %v411
      %v417 = vmul.f32 %v405, %v409
      %421 = vrot.lane.b32.xlu0 %v415, 110
      %v422 = vpop.permute.xlu0 %421
      %423 = vrot.lane.b32.xlu0 %v416, 110
      %v424 = vpop.permute.xlu0 %423
      %425 = vrot.lane.b32.xlu0 %v417, 110
      %v426 = vpop.permute.xlu0 %425
      %vm427 = vcmask 900096
      %v428 = vsel %vm427, %v422, %v424
      %v429 = vsel %vm427, %v424, %v426
      %432 = vst [vmem:[#allocation2 + $0x50] sm:$0xff] %v428
      %433 = vst [vmem:[#allocation2 + $0x58] sm:$0xff] %v429
      %v434 = vld [vmem:[%s248] sm:$0xff]
      %v435 = vld [vmem:[%s248 + $0x8] sm:$0xff]
      %v436 = vld [vmem:[%s248 + $0x10] sm:$0xff]
      %437 = vrot.lane.b32.xlu0 %v285, 32
      %v438 = vpop.permute.xlu0 %437
      %439 = vrot.lane.b32.xlu0 %v286, 32
      %v440 = vpop.permute.xlu0 %439
      %vm441 = vcmask 261120
      %v442 = vsel %vm441, %v438, %v440
      %v446 = vmul.f32 %v434, %v438
      %v447 = vmul.f32 %v435, %v442
      %v448 = vmul.f32 %v436, %v440
      %452 = vrot.lane.b32.xlu0 %v446, 96
      %v453 = vpop.permute.xlu0 %452
      %454 = vrot.lane.b32.xlu0 %v447, 96
      %v455 = vpop.permute.xlu0 %454
      %456 = vrot.lane.b32.xlu0 %v448, 96
      %v457 = vpop.permute.xlu0 %456
      %vm458 = vcmask 785408
      %v459 = vsel %vm458, %v453, %v455
      %v460 = vsel %vm458, %v455, %v457
      %463 = vst [vmem:[#allocation2 + $0x60] sm:$0xff] %v459
      %464 = vst [vmem:[#allocation2 + $0x68] sm:$0xff] %v460
      %v465 = vld [vmem:[%s248] sm:$0xff]
      %v466 = vld [vmem:[%s248 + $0x8] sm:$0xff]
      %v467 = vld [vmem:[%s248 + $0x10] sm:$0xff]
      %471 = vrot.lane.b32.xlu0 %v465, 95
      %v472 = vpop.permute.xlu0 %471
      %473 = vrot.lane.b32.xlu0 %v466, 95
      %v474 = vpop.permute.xlu0 %473
      %475 = vrot.lane.b32.xlu0 %v467, 95
      %v476 = vpop.permute.xlu0 %475
      %vm477 = vcmask 777216
      %v478 = vsel %vm477, %v472, %v474
      %v479 = vsel %vm477, %v474, %v476
      %482 = vst [vmem:[#allocation2 + $0x70] sm:$0xff] %v478
      %483 = vst [vmem:[#allocation2 + $0x78] sm:$0xff] %v479
      %v484 = vld [vmem:[%s248] sm:$0xff]
      %v485 = vld [vmem:[%s248 + $0x8] sm:$0xff]
      %v486 = vld [vmem:[%s248 + $0x10] sm:$0xff]
      %487 = vrot.lane.b32.xlu0 %v291, 34
      %v488 = vpop.permute.xlu0 %487
      %489 = vrot.lane.b32.xlu0 %v292, 34
      %v490 = vpop.permute.xlu0 %489
      %vm491 = vcmask 277504
      %v492 = vsel %vm491, %v488, %v490
      %v496 = vmul.f32 %v484, %v488
      %v497 = vmul.f32 %v485, %v492
      %v498 = vmul.f32 %v486, %v490
      %502 = vrot.lane.b32.xlu0 %v496, 94
      %v503 = vpop.permute.xlu0 %502
      %504 = vrot.lane.b32.xlu0 %v497, 94
      %v505 = vpop.permute.xlu0 %504
      %506 = vrot.lane.b32.xlu0 %v498, 94
      %v507 = vpop.permute.xlu0 %506
      %vm508 = vcmask 769024
      %v509 = vsel %vm508, %v503, %v505
      %v510 = vsel %vm508, %v505, %v507
      %513 = vst [vmem:[#allocation2 + $0x80] sm:$0xff] %v509
      %514 = vst [vmem:[#allocation2 + $0x88] sm:$0xff] %v510
      %v515 = vld [vmem:[%s3] sm:$0xff]
      %v516 = vld [vmem:[%s3 + $0x8] sm:$0xff]
      %v517 = vld [vmem:[%s3 + $0x10] sm:$0xff]
      %v518 = vld [vmem:[%s1] sm:$0xff]
      %v519 = vld [vmem:[%s1 + $0x8] sm:$0xff]
      %v520 = vld [vmem:[%s1 + $0x10] sm:$0xff]
      %v521 = vld [vmem:[#allocation2] sm:$0xff]
      %v522 = vld [vmem:[#allocation2 + $0x8] sm:$0xff]
      %v523 = vld [vmem:[#allocation2 + $0x10] sm:$0xff]
      %v524 = vld [vmem:[#allocation2 + $0x18] sm:$0xff]
      %v525 = vld [vmem:[#allocation2 + $0x20] sm:$0xff]
      %v526 = vld [vmem:[#allocation2 + $0x28] sm:$0xff]
      %v527 = vld [vmem:[#allocation2 + $0x30] sm:$0xff]
      %v528 = vld [vmem:[#allocation2 + $0x38] sm:$0xff]
      %v529 = vld [vmem:[#allocation2 + $0x40] sm:$0xff]
      %v530 = vld [vmem:[#allocation2 + $0x48] sm:$0xff]
      %v531 = vld [vmem:[#allocation2 + $0x50] sm:$0xff]
      %v532 = vld [vmem:[#allocation2 + $0x58] sm:$0xff]
      %v533 = vld [vmem:[#allocation2 + $0x60] sm:$0xff]
      %v534 = vld [vmem:[#allocation2 + $0x68] sm:$0xff]
      %v535 = vld [vmem:[#allocation2 + $0x70] sm:$0xff]
      %v536 = vld [vmem:[#allocation2 + $0x78] sm:$0xff]
      %v537 = vld [vmem:[#allocation2 + $0x80] sm:$0xff]
      %v538 = vld [vmem:[#allocation2 + $0x88] sm:$0xff]
      %540 = vset.pattern.permute.xlu0 0
      %541 = vperm.xlu0 %540, %v515
      %v542 = vpop.permute.xlu0 %541
      %545 = vset.pattern.permute.xlu0 0
      %546 = vperm.xlu0 %545, %v516
      %v547 = vpop.permute.xlu0 %546
      %550 = vset.pattern.permute.xlu0 0
      %551 = vperm.xlu0 %550, %v517
      %v552 = vpop.permute.xlu0 %551
      %vm554 = vcmask 588800
      %v556 = vsel %vm554, %v518, 0
      %v559 = vsel %vm554, %v519, 0
      %v562 = vsel %vm554, %v520, 0
      %564 = vmatprep.subr.mxu0 %v522
      %565 = vmatpush1.msra.mxu0 %v521
      %566 = vmatprep.subr.mxu0 %v524
      %567 = vmatpush1.msra.mxu0 %v523
      %568 = vmatprep.subr.mxu0 %v526
      %569 = vmatpush1.msra.mxu0 %v525
      %570 = vmatprep.subr.mxu0 %v528
      %571 = vmatpush1.msra.mxu0 %v527
      %572 = vmatprep.subr.mxu0 %v530
      %573 = vmatpush1.msra.mxu0 %v529
      %574 = vmatprep.subr.mxu0 %v532
      %575 = vmatpush1.msra.mxu0 %v531
      %576 = vmatprep.subr.mxu0 %v534
      %577 = vmatpush1.msra.mxu0 %v533
      %578 = vmatprep.subr.mxu0 %v536
      %579 = vmatpush1.msra.mxu0 %v535
      %580 = vmatprep.subr.mxu0 %v538
      %581 = vmatpush1.msra.mxu0 %v537
      %582 = vmatprep.subr.mxu0 0.0
      %583 = vmatpush1.msra.mxu0 0.0
      %584 = vmatprep.subr.mxu0 0.0
      %585 = vmatpush1.msra.mxu0 0.0
      %586 = vmatprep.subr.mxu0 0.0
      %587 = vmatpush1.msra.mxu0 0.0
      %588 = vmatprep.subr.mxu0 0.0
      %589 = vmatpush1.msra.mxu0 0.0
      %590 = vmatprep.subr.mxu0 0.0
      %591 = vmatpush1.msra.mxu0 0.0
      %592 = vmatprep.subr.mxu0 0.0
      %593 = vmatpush1.msra.mxu0 0.0
      %594 = vmatprep.subr.mxu0 0.0
      %595 = vmatpush1.msra.mxu0 0.0
      %596 = vmatprep.subr.mxu0 0.0
      %597 = vmatpush1.msra.mxu0 0.0
      %598 = vmatprep.subr.mxu0 0.0
      %599 = vmatpush1.msra.mxu0 0.0
      %600 = vmatprep.subr.mxu0 0.0
      %601 = vmatpush1.msra.mxu0 0.0
      %602 = vmatprep.subr.mxu0 0.0
      %603 = vmatpush1.msra.mxu0 0.0
      %604 = vmatprep.subr.mxu0 0.0
      %605 = vmatpush1.msra.mxu0 0.0
      %606 = vmatprep.subr.mxu0 0.0
      %607 = vmatpush1.msra.mxu0 0.0
      %608 = vmatprep.subr.mxu0 0.0
      %609 = vmatpush1.msra.mxu0 0.0
      %610 = vmatprep.subr.mxu0 0.0
      %611 = vmatpush1.msra.mxu0 0.0
      %612 = vmatprep.subr.mxu0 0.0
      %613 = vmatpush1.msra.mxu0 0.0
      %614 = vmatprep.subr.mxu0 0.0
      %615 = vmatpush1.msra.mxu0 0.0
      %616 = vmatprep.subr.mxu0 0.0
      %617 = vmatpush1.msra.mxu0 0.0
      %618 = vmatprep.subr.mxu0 0.0
      %619 = vmatpush1.msra.mxu0 0.0
      %620 = vmatprep.subr.mxu0 0.0
      %621 = vmatpush1.msra.mxu0 0.0
      %622 = vmatprep.subr.mxu0 0.0
      %623 = vmatpush1.msra.mxu0 0.0
      %624 = vmatprep.subr.mxu0 0.0
      %625 = vmatpush1.msra.mxu0 0.0
      %626 = vmatprep.subr.mxu0 0.0
      %627 = vmatpush1.msra.mxu0 0.0
      %628 = vmatprep.mubr.f32.mxu0 0.0
      %629 = vmatmul.mubr.f32.gmra.mrb[0].mxu0 %v556
      %v630 = vpop.f32.mrb[0].mxu0
      %v631 = vadd.f32 %v542, %v630
      %v632 = vpop.f32.mrb[0].mxu0
      %v633 = vadd.f32 %v542, %v632
      %634 = vmatprep.mubr.f32.mxu0 0.0
      %635 = vmatmul.mubr.f32.gmra.mrb[0].mxu0 %v559
      %v636 = vpop.f32.mrb[0].mxu0
      %v637 = vadd.f32 %v547, %v636
      %v638 = vpop.f32.mrb[0].mxu0
      %v639 = vadd.f32 %v547, %v638
      %640 = vmatprep.mubr.f32.mxu0 0.0
      %641 = vmatmul.mubr.f32.gmra.mrb[0].mxu0 %v562
      %v642 = vpop.f32.mrb[0].mxu0
      %v643 = vadd.f32 %v552, %v642
      %v644 = vpop.f32.mrb[0].mxu0
      %v645 = vadd.f32 %v552, %v644
      %646 = vdwg.mxu0
      %v647 = vand.u32 2147483647, %v631
      %v648 = vand.u32 2147483647, %v633
      %v649 = vand.u32 2147483647, %v637
      %v650 = vand.u32 2147483647, %v639
      %v651 = vand.u32 2147483647, %v643
      %v652 = vand.u32 2147483647, %v645
      %v653 = vsub.f32 0.0, %v647
      %v654 = vsub.f32 0.0, %v648
      %v655 = vsub.f32 0.0, %v649
      %v656 = vsub.f32 0.0, %v650
      %v657 = vsub.f32 0.0, %v651
      %v658 = vsub.f32 0.0, %v652
      %v659 = vmul.f32 %v653, 1.442695
      %v660 = vpow.pop %v659
      %v661 = vmul.f32 %v654, 1.442695
      %v662 = vpow.pop %v661
      %v663 = vmul.f32 %v655, 1.442695
      %v664 = vpow.pop %v663
      %v665 = vmul.f32 %v656, 1.442695
      %v666 = vpow.pop %v665
      %v667 = vmul.f32 %v657, 1.442695
      %v668 = vpow.pop %v667
      %v669 = vmul.f32 %v658, 1.442695
      %v670 = vpow.pop %v669
      %v671 = vadd.f32 %v660, 1.0
      %v672 = vadd.f32 %v662, 1.0
      %v673 = vadd.f32 %v664, 1.0
      %v674 = vadd.f32 %v666, 1.0
      %v675 = vadd.f32 %v668, 1.0
      %v676 = vadd.f32 %v670, 1.0
      %v677 = vrcp.pop %v671
      %v678 = vmul.f32 1.0, %v677
      %v679 = vrcp.pop %v672
      %v680 = vmul.f32 1.0, %v679
      %v681 = vrcp.pop %v673
      %v682 = vmul.f32 1.0, %v681
      %v683 = vrcp.pop %v674
      %v684 = vmul.f32 1.0, %v683
      %v685 = vrcp.pop %v675
      %v686 = vmul.f32 1.0, %v685
      %v687 = vrcp.pop %v676
      %v688 = vmul.f32 1.0, %v687
      %vm689 = vcmp.ge.f32.partialorder %v631, 0.0
      %vm690 = vcmp.ge.f32.partialorder %v633, 0.0
      %vm691 = vcmp.ge.f32.partialorder %v637, 0.0
      %vm692 = vcmp.ge.f32.partialorder %v639, 0.0
      %vm693 = vcmp.ge.f32.partialorder %v643, 0.0
      %vm694 = vcmp.ge.f32.partialorder %v645, 0.0
      %v695 = vsub.f32 1.0, %v678
      %v696 = vsub.f32 1.0, %v680
      %v697 = vsub.f32 1.0, %v682
      %v698 = vsub.f32 1.0, %v684
      %v699 = vsub.f32 1.0, %v686
      %v700 = vsub.f32 1.0, %v688
      %v701 = vsel %vm689, %v678, %v695
      %v702 = vsel %vm690, %v680, %v696
      %v703 = vsel %vm691, %v682, %v697
      %v704 = vsel %vm692, %v684, %v698
      %v705 = vsel %vm693, %v686, %v699
      %v706 = vsel %vm694, %v688, %v700
      %v707 = vmul.f32 %v631, %v701
      %v708 = vmul.f32 %v633, %v702
      %v709 = vmul.f32 %v637, %v703
      %v710 = vmul.f32 %v639, %v704
      %v711 = vmul.f32 %v643, %v705
      %v712 = vmul.f32 %v645, %v706
      %vm713 = vcmask 138240
      %714 = vst.msk [vmem:[#allocation3] sm:$0xff] %vm713, 0.0
      %715 = vst.msk [vmem:[#allocation3 + $0x18] sm:$0xff] %vm713, 0.0
      %716 = vst.msk [vmem:[#allocation3 + $0x30] sm:$0xff] %vm713, 0.0
      %vm717 = vcmask 277640
      %718 = vst.msk [vmem:[#allocation3 + $0x10] sm:$0xff] %vm717, 0.0
      %719 = vst.msk [vmem:[#allocation3 + $0x28] sm:$0xff] %vm717, 0.0
      %720 = vst.msk [vmem:[#allocation3 + $0x40] sm:$0xff] %vm717, 0.0
      %727 = vrot.lane.b32.xlu0 %v707, 17
      %v728 = vpop.permute.xlu0 %727
      %729 = vrot.lane.b32.xlu0 %v708, 17
      %v730 = vpop.permute.xlu0 %729
      %731 = vrot.lane.b32.xlu0 %v709, 17
      %v732 = vpop.permute.xlu0 %731
      %733 = vrot.lane.b32.xlu0 %v710, 17
      %v734 = vpop.permute.xlu0 %733
      %735 = vrot.lane.b32.xlu0 %v711, 17
      %v736 = vpop.permute.xlu0 %735
      %737 = vrot.lane.b32.xlu0 %v712, 17
      %v738 = vpop.permute.xlu0 %737
      %v739 = vsel %vm713, %v728, %v730
      %v740 = vsel %vm713, %v732, %v734
      %v741 = vsel %vm713, %v736, %v738
      %vm751 = vcmask 1047688
      %752 = vst.msk [vmem:[#allocation3] sm:$0xff] %vm751, %v728
      %753 = vst [vmem:[#allocation3 + $0x8] sm:$0xff] %v739
      %754 = vst.msk [vmem:[#allocation3 + $0x10] sm:$0xff] %vm713, %v730
      %755 = vst.msk [vmem:[#allocation3 + $0x18] sm:$0xff] %vm751, %v732
      %756 = vst [vmem:[#allocation3 + $0x20] sm:$0xff] %v740
      %757 = vst.msk [vmem:[#allocation3 + $0x28] sm:$0xff] %vm713, %v734
      %758 = vst.msk [vmem:[#allocation3 + $0x30] sm:$0xff] %vm751, %v736
      %759 = vst [vmem:[#allocation3 + $0x38] sm:$0xff] %v741
      %760 = vst.msk [vmem:[#allocation3 + $0x40] sm:$0xff] %vm713, %v738
      %v761 = vld [vmem:[%s3] sm:$0xff]
      %v762 = vld [vmem:[%s3 + $0x8] sm:$0xff]
      %v763 = vld [vmem:[%s3 + $0x10] sm:$0xff]
      %v764 = vld [vmem:[#allocation3] sm:$0xff]
      %v765 = vld [vmem:[#allocation3 + $0x8] sm:$0xff]
      %v766 = vld [vmem:[#allocation3 + $0x18] sm:$0xff]
      %v767 = vld [vmem:[#allocation3 + $0x20] sm:$0xff]
      %v768 = vld [vmem:[#allocation3 + $0x30] sm:$0xff]
      %v769 = vld [vmem:[#allocation3 + $0x38] sm:$0xff]
      %771 = vset.pattern.permute.xlu0 3
      %772 = vperm.xlu0 %771, %v761
      %v773 = vpop.permute.xlu0 %772
      %776 = vset.pattern.permute.xlu0 3
      %777 = vperm.xlu0 %776, %v762
      %v778 = vpop.permute.xlu0 %777
      %781 = vset.pattern.permute.xlu0 3
      %782 = vperm.xlu0 %781, %v763
      %v783 = vpop.permute.xlu0 %782
      %v785 = vmul.f32 %v773, %v764
      %v786 = vmul.f32 %v773, %v765
      %v787 = vmul.f32 %v778, %v766
      %v788 = vmul.f32 %v778, %v767
      %v789 = vmul.f32 %v783, %v768
      %v790 = vmul.f32 %v783, %v769
      %v791 = vadd.f32 %v785, 0.0
      %v792 = vadd.f32 %v786, 0.0
      %v793 = vadd.f32 %v787, 0.0
      %v794 = vadd.f32 %v788, 0.0
      %v795 = vadd.f32 %v789, 0.0
      %v796 = vadd.f32 %v790, 0.0
      %v797 = vld [vmem:[#allocation3] sm:$0xff]
      %v798 = vld [vmem:[#allocation3 + $0x8] sm:$0xff]
      %v799 = vld [vmem:[#allocation3 + $0x10] sm:$0xff]
      %v800 = vld [vmem:[#allocation3 + $0x18] sm:$0xff]
      %v801 = vld [vmem:[#allocation3 + $0x20] sm:$0xff]
      %v802 = vld [vmem:[#allocation3 + $0x28] sm:$0xff]
      %v803 = vld [vmem:[#allocation3 + $0x30] sm:$0xff]
      %v804 = vld [vmem:[#allocation3 + $0x38] sm:$0xff]
      %v805 = vld [vmem:[#allocation3 + $0x40] sm:$0xff]
      %806 = vset.pattern.permute.xlu0 6
      %807 = vperm.xlu0 %806, %v761
      %v808 = vpop.permute.xlu0 %807
      %810 = vset.pattern.permute.xlu0 6
      %811 = vperm.xlu0 %810, %v762
      %v812 = vpop.permute.xlu0 %811
      %814 = vset.pattern.permute.xlu0 6
      %815 = vperm.xlu0 %814, %v763
      %v816 = vpop.permute.xlu0 %815
      %v818 = vmul.f32 %v808, %v797
      %v819 = vmul.f32 %v808, %v798
      %v820 = vmul.f32 %v808, %v799
      %v821 = vmul.f32 %v812, %v800
      %v822 = vmul.f32 %v812, %v801
      %v823 = vmul.f32 %v812, %v802
      %v824 = vmul.f32 %v816, %v803
      %v825 = vmul.f32 %v816, %v804
      %v826 = vmul.f32 %v816, %v805
      %836 = vrot.lane.b32.xlu0 %v818, 112
      %v837 = vpop.permute.xlu0 %836
      %838 = vrot.lane.b32.xlu0 %v819, 112
      %v839 = vpop.permute.xlu0 %838
      %840 = vrot.lane.b32.xlu0 %v820, 112
      %v841 = vpop.permute.xlu0 %840
      %842 = vrot.lane.b32.xlu0 %v821, 112
      %v843 = vpop.permute.xlu0 %842
      %844 = vrot.lane.b32.xlu0 %v822, 112
      %v845 = vpop.permute.xlu0 %844
      %846 = vrot.lane.b32.xlu0 %v823, 112
      %v847 = vpop.permute.xlu0 %846
      %848 = vrot.lane.b32.xlu0 %v824, 112
      %v849 = vpop.permute.xlu0 %848
      %850 = vrot.lane.b32.xlu0 %v825, 112
      %v851 = vpop.permute.xlu0 %850
      %852 = vrot.lane.b32.xlu0 %v826, 112
      %v853 = vpop.permute.xlu0 %852
      %v854 = vsel %vm377, %v837, %v839
      %v855 = vsel %vm377, %v839, %v841
      %v856 = vsel %vm377, %v843, %v845
      %v857 = vsel %vm377, %v845, %v847
      %v858 = vsel %vm377, %v849, %v851
      %v859 = vsel %vm377, %v851, %v853
      %v866 = vadd.f32 %v791, %v854
      %v867 = vadd.f32 %v792, %v855
      %v868 = vadd.f32 %v793, %v856
      %v869 = vadd.f32 %v794, %v857
      %v870 = vadd.f32 %v795, %v858
      %v871 = vadd.f32 %v796, %v859
      %872 = vset.pattern.permute.xlu0 9
      %873 = vperm.xlu0 %872, %v761
      %v874 = vpop.permute.xlu0 %873
      %876 = vset.pattern.permute.xlu0 9
      %877 = vperm.xlu0 %876, %v762
      %v878 = vpop.permute.xlu0 %877
      %880 = vset.pattern.permute.xlu0 9
      %881 = vperm.xlu0 %880, %v763
      %v882 = vpop.permute.xlu0 %881
      %v884 = vmul.f32 %v874, %v797
      %v885 = vmul.f32 %v874, %v798
      %v886 = vmul.f32 %v874, %v799
      %v887 = vmul.f32 %v878, %v800
      %v888 = vmul.f32 %v878, %v801
      %v889 = vmul.f32 %v878, %v802
      %v890 = vmul.f32 %v882, %v803
      %v891 = vmul.f32 %v882, %v804
      %v892 = vmul.f32 %v882, %v805
      %902 = vrot.lane.b32.xlu0 %v884, 96
      %v903 = vpop.permute.xlu0 %902
      %904 = vrot.lane.b32.xlu0 %v885, 96
      %v905 = vpop.permute.xlu0 %904
      %906 = vrot.lane.b32.xlu0 %v886, 96
      %v907 = vpop.permute.xlu0 %906
      %908 = vrot.lane.b32.xlu0 %v887, 96
      %v909 = vpop.permute.xlu0 %908
      %910 = vrot.lane.b32.xlu0 %v888, 96
      %v911 = vpop.permute.xlu0 %910
      %912 = vrot.lane.b32.xlu0 %v889, 96
      %v913 = vpop.permute.xlu0 %912
      %914 = vrot.lane.b32.xlu0 %v890, 96
      %v915 = vpop.permute.xlu0 %914
      %916 = vrot.lane.b32.xlu0 %v891, 96
      %v917 = vpop.permute.xlu0 %916
      %918 = vrot.lane.b32.xlu0 %v892, 96
      %v919 = vpop.permute.xlu0 %918
      %v920 = vsel %vm458, %v903, %v905
      %v921 = vsel %vm458, %v905, %v907
      %v922 = vsel %vm458, %v909, %v911
      %v923 = vsel %vm458, %v911, %v913
      %v924 = vsel %vm458, %v915, %v917
      %v925 = vsel %vm458, %v917, %v919
      %v932 = vadd.f32 %v866, %v920
      %v933 = vadd.f32 %v867, %v921
      %v934 = vadd.f32 %v868, %v922
      %v935 = vadd.f32 %v869, %v923
      %v936 = vadd.f32 %v870, %v924
      %v937 = vadd.f32 %v871, %v925
      %v938 = vmul.f32 %v932, %v285
      %v939 = vmul.f32 %v933, %v286
      %v940 = vmul.f32 %v934, %v285
      %v941 = vmul.f32 %v935, %v286
      %v942 = vmul.f32 %v936, %v285
      %v943 = vmul.f32 %v937, %v286
      %v944 = vadd.f32 %v938, 0.0
      %v945 = vadd.f32 %v939, 0.0
      %v946 = vadd.f32 %v940, 0.0
      %v947 = vadd.f32 %v941, 0.0
      %v948 = vadd.f32 %v942, 0.0
      %v949 = vadd.f32 %v943, 0.0
      %950 = vset.pattern.permute.xlu0 4
      %951 = vperm.xlu0 %950, %v761
      %v952 = vpop.permute.xlu0 %951
      %954 = vset.pattern.permute.xlu0 4
      %955 = vperm.xlu0 %954, %v762
      %v956 = vpop.permute.xlu0 %955
      %958 = vset.pattern.permute.xlu0 4
      %959 = vperm.xlu0 %958, %v763
      %v960 = vpop.permute.xlu0 %959
      %v962 = vmul.f32 %v952, %v797
      %v963 = vmul.f32 %v952, %v798
      %v964 = vmul.f32 %v952, %v799
      %v965 = vmul.f32 %v956, %v800
      %v966 = vmul.f32 %v956, %v801
      %v967 = vmul.f32 %v956, %v802
      %v968 = vmul.f32 %v960, %v803
      %v969 = vmul.f32 %v960, %v804
      %v970 = vmul.f32 %v960, %v805
      %v971 = vadd.f32 %v962, 0.0
      %v972 = vadd.f32 %v963, 0.0
      %v973 = vadd.f32 %v964, 0.0
      %v974 = vadd.f32 %v965, 0.0
      %v975 = vadd.f32 %v966, 0.0
      %v976 = vadd.f32 %v967, 0.0
      %v977 = vadd.f32 %v968, 0.0
      %v978 = vadd.f32 %v969, 0.0
      %v979 = vadd.f32 %v970, 0.0
      %980 = vset.pattern.permute.xlu0 7
      %981 = vperm.xlu0 %980, %v761
      %v982 = vpop.permute.xlu0 %981
      %984 = vset.pattern.permute.xlu0 7
      %985 = vperm.xlu0 %984, %v762
      %v986 = vpop.permute.xlu0 %985
      %988 = vset.pattern.permute.xlu0 7
      %989 = vperm.xlu0 %988, %v763
      %v990 = vpop.permute.xlu0 %989
      %v992 = vmul.f32 %v982, %v797
      %v993 = vmul.f32 %v982, %v798
      %v994 = vmul.f32 %v982, %v799
      %v995 = vmul.f32 %v986, %v800
      %v996 = vmul.f32 %v986, %v801
      %v997 = vmul.f32 %v986, %v802
      %v998 = vmul.f32 %v990, %v803
      %v999 = vmul.f32 %v990, %v804
      %v1000 = vmul.f32 %v990, %v805
      %1010 = vrot.lane.b32.xlu0 %v992, 112
      %v1011 = vpop.permute.xlu0 %1010
      %1012 = vrot.lane.b32.xlu0 %v993, 112
      %v1013 = vpop.permute.xlu0 %1012
      %1014 = vrot.lane.b32.xlu0 %v994, 112
      %v1015 = vpop.permute.xlu0 %1014
      %1016 = vrot.lane.b32.xlu0 %v995, 112
      %v1017 = vpop.permute.xlu0 %1016
      %1018 = vrot.lane.b32.xlu0 %v996, 112
      %v1019 = vpop.permute.xlu0 %1018
      %1020 = vrot.lane.b32.xlu0 %v997, 112
      %v1021 = vpop.permute.xlu0 %1020
      %1022 = vrot.lane.b32.xlu0 %v998, 112
      %v1023 = vpop.permute.xlu0 %1022
      %1024 = vrot.lane.b32.xlu0 %v999, 112
      %v1025 = vpop.permute.xlu0 %1024
      %1026 = vrot.lane.b32.xlu0 %v1000, 112
      %v1027 = vpop.permute.xlu0 %1026
      %v1028 = vsel %vm377, %v1011, %v1013
      %v1029 = vsel %vm377, %v1013, %v1015
      %v1030 = vsel %vm377, %v1017, %v1019
      %v1031 = vsel %vm377, %v1019, %v1021
      %v1032 = vsel %vm377, %v1023, %v1025
      %v1033 = vsel %vm377, %v1025, %v1027
      %v1043 = vadd.f32 %v971, %v1028
      %v1044 = vadd.f32 %v972, %v1029
      %v1045 = vadd.f32 %v973, %v1015
      %v1046 = vadd.f32 %v974, %v1030
      %v1047 = vadd.f32 %v975, %v1031
      %v1048 = vadd.f32 %v976, %v1021
      %v1049 = vadd.f32 %v977, %v1032
      %v1050 = vadd.f32 %v978, %v1033
      %v1051 = vadd.f32 %v979, %v1027
      %1052 = vset.pattern.permute.xlu0 10
      %1053 = vperm.xlu0 %1052, %v761
      %v1054 = vpop.permute.xlu0 %1053
      %1056 = vset.pattern.permute.xlu0 10
      %1057 = vperm.xlu0 %1056, %v762
      %v1058 = vpop.permute.xlu0 %1057
      %1060 = vset.pattern.permute.xlu0 10
      %1061 = vperm.xlu0 %1060, %v763
      %v1062 = vpop.permute.xlu0 %1061
      %v1064 = vmul.f32 %v1054, %v797
      %v1065 = vmul.f32 %v1054, %v798
      %v1066 = vmul.f32 %v1054, %v799
      %v1067 = vmul.f32 %v1058, %v800
      %v1068 = vmul.f32 %v1058, %v801
      %v1069 = vmul.f32 %v1058, %v802
      %v1070 = vmul.f32 %v1062, %v803
      %v1071 = vmul.f32 %v1062, %v804
      %v1072 = vmul.f32 %v1062, %v805
      %1082 = vrot.lane.b32.xlu0 %v1064, 96
      %v1083 = vpop.permute.xlu0 %1082
      %1084 = vrot.lane.b32.xlu0 %v1065, 96
      %v1085 = vpop.permute.xlu0 %1084
      %1086 = vrot.lane.b32.xlu0 %v1066, 96
      %v1087 = vpop.permute.xlu0 %1086
      %1088 = vrot.lane.b32.xlu0 %v1067, 96
      %v1089 = vpop.permute.xlu0 %1088
      %1090 = vrot.lane.b32.xlu0 %v1068, 96
      %v1091 = vpop.permute.xlu0 %1090
      %1092 = vrot.lane.b32.xlu0 %v1069, 96
      %v1093 = vpop.permute.xlu0 %1092
      %1094 = vrot.lane.b32.xlu0 %v1070, 96
      %v1095 = vpop.permute.xlu0 %1094
      %1096 = vrot.lane.b32.xlu0 %v1071, 96
      %v1097 = vpop.permute.xlu0 %1096
      %1098 = vrot.lane.b32.xlu0 %v1072, 96
      %v1099 = vpop.permute.xlu0 %1098
      %v1100 = vsel %vm458, %v1083, %v1085
      %v1101 = vsel %vm458, %v1085, %v1087
      %v1102 = vsel %vm458, %v1089, %v1091
      %v1103 = vsel %vm458, %v1091, %v1093
      %v1104 = vsel %vm458, %v1095, %v1097
      %v1105 = vsel %vm458, %v1097, %v1099
      %v1115 = vadd.f32 %v1043, %v1100
      %v1116 = vadd.f32 %v1044, %v1101
      %v1117 = vadd.f32 %v1045, %v1087
      %v1118 = vadd.f32 %v1046, %v1102
      %v1119 = vadd.f32 %v1047, %v1103
      %v1120 = vadd.f32 %v1048, %v1093
      %v1121 = vadd.f32 %v1049, %v1104
      %v1122 = vadd.f32 %v1050, %v1105
      %v1123 = vadd.f32 %v1051, %v1099
      %1133 = vrot.lane.b32.xlu0 %v1115, 127
      %v1134 = vpop.permute.xlu0 %1133
      %1135 = vrot.lane.b32.xlu0 %v1116, 127
      %v1136 = vpop.permute.xlu0 %1135
      %1137 = vrot.lane.b32.xlu0 %v1117, 127
      %v1138 = vpop.permute.xlu0 %1137
      %1139 = vrot.lane.b32.xlu0 %v1118, 127
      %v1140 = vpop.permute.xlu0 %1139
      %1141 = vrot.lane.b32.xlu0 %v1119, 127
      %v1142 = vpop.permute.xlu0 %1141
      %1143 = vrot.lane.b32.xlu0 %v1120, 127
      %v1144 = vpop.permute.xlu0 %1143
      %1145 = vrot.lane.b32.xlu0 %v1121, 127
      %v1146 = vpop.permute.xlu0 %1145
      %1147 = vrot.lane.b32.xlu0 %v1122, 127
      %v1148 = vpop.permute.xlu0 %1147
      %1149 = vrot.lane.b32.xlu0 %v1123, 127
      %v1150 = vpop.permute.xlu0 %1149
      %v1151 = vsel %vm311, %v1134, %v1136
      %v1152 = vsel %vm311, %v1136, %v1138
      %v1153 = vsel %vm311, %v1140, %v1142
      %v1154 = vsel %vm311, %v1142, %v1144
      %v1155 = vsel %vm311, %v1146, %v1148
      %v1156 = vsel %vm311, %v1148, %v1150
      %v1163 = vadd.f32 %v944, %v1151
      %v1164 = vadd.f32 %v945, %v1152
      %v1165 = vadd.f32 %v946, %v1153
      %v1166 = vadd.f32 %v947, %v1154
      %v1167 = vadd.f32 %v948, %v1155
      %v1168 = vadd.f32 %v949, %v1156
      %1169 = vset.pattern.permute.xlu0 5
      %1170 = vperm.xlu0 %1169, %v761
      %v1171 = vpop.permute.xlu0 %1170
      %1173 = vset.pattern.permute.xlu0 5
      %1174 = vperm.xlu0 %1173, %v762
      %v1175 = vpop.permute.xlu0 %1174
      %1177 = vset.pattern.permute.xlu0 5
      %1178 = vperm.xlu0 %1177, %v763
      %v1179 = vpop.permute.xlu0 %1178
      %v1181 = vmul.f32 %v1171, %v797
      %v1182 = vmul.f32 %v1171, %v798
      %v1183 = vmul.f32 %v1171, %v799
      %v1184 = vmul.f32 %v1175, %v800
      %v1185 = vmul.f32 %v1175, %v801
      %v1186 = vmul.f32 %v1175, %v802
      %v1187 = vmul.f32 %v1179, %v803
      %v1188 = vmul.f32 %v1179, %v804
      %v1189 = vmul.f32 %v1179, %v805
      %v1190 = vadd.f32 %v1181, 0.0
      %v1191 = vadd.f32 %v1182, 0.0
      %v1192 = vadd.f32 %v1183, 0.0
      %v1193 = vadd.f32 %v1184, 0.0
      %v1194 = vadd.f32 %v1185, 0.0
      %v1195 = vadd.f32 %v1186, 0.0
      %v1196 = vadd.f32 %v1187, 0.0
      %v1197 = vadd.f32 %v1188, 0.0
      %v1198 = vadd.f32 %v1189, 0.0
      %1199 = vset.pattern.permute.xlu0 8
      %1200 = vperm.xlu0 %1199, %v761
      %v1201 = vpop.permute.xlu0 %1200
      %1203 = vset.pattern.permute.xlu0 8
      %1204 = vperm.xlu0 %1203, %v762
      %v1205 = vpop.permute.xlu0 %1204
      %1207 = vset.pattern.permute.xlu0 8
      %1208 = vperm.xlu0 %1207, %v763
      %v1209 = vpop.permute.xlu0 %1208
      %v1211 = vmul.f32 %v1201, %v797
      %v1212 = vmul.f32 %v1201, %v798
      %v1213 = vmul.f32 %v1201, %v799
      %v1214 = vmul.f32 %v1205, %v800
      %v1215 = vmul.f32 %v1205, %v801
      %v1216 = vmul.f32 %v1205, %v802
      %v1217 = vmul.f32 %v1209, %v803
      %v1218 = vmul.f32 %v1209, %v804
      %v1219 = vmul.f32 %v1209, %v805
      %1229 = vrot.lane.b32.xlu0 %v1211, 112
      %v1230 = vpop.permute.xlu0 %1229
      %1231 = vrot.lane.b32.xlu0 %v1212, 112
      %v1232 = vpop.permute.xlu0 %1231
      %1233 = vrot.lane.b32.xlu0 %v1213, 112
      %v1234 = vpop.permute.xlu0 %1233
      %1235 = vrot.lane.b32.xlu0 %v1214, 112
      %v1236 = vpop.permute.xlu0 %1235
      %1237 = vrot.lane.b32.xlu0 %v1215, 112
      %v1238 = vpop.permute.xlu0 %1237
      %1239 = vrot.lane.b32.xlu0 %v1216, 112
      %v1240 = vpop.permute.xlu0 %1239
      %1241 = vrot.lane.b32.xlu0 %v1217, 112
      %v1242 = vpop.permute.xlu0 %1241
      %1243 = vrot.lane.b32.xlu0 %v1218, 112
      %v1244 = vpop.permute.xlu0 %1243
      %1245 = vrot.lane.b32.xlu0 %v1219, 112
      %v1246 = vpop.permute.xlu0 %1245
      %v1247 = vsel %vm377, %v1230, %v1232
      %v1248 = vsel %vm377, %v1232, %v1234
      %v1249 = vsel %vm377, %v1236, %v1238
      %v1250 = vsel %vm377, %v1238, %v1240
      %v1251 = vsel %vm377, %v1242, %v1244
      %v1252 = vsel %vm377, %v1244, %v1246
      %v1262 = vadd.f32 %v1190, %v1247
      %v1263 = vadd.f32 %v1191, %v1248
      %v1264 = vadd.f32 %v1192, %v1234
      %v1265 = vadd.f32 %v1193, %v1249
      %v1266 = vadd.f32 %v1194, %v1250
      %v1267 = vadd.f32 %v1195, %v1240
      %v1268 = vadd.f32 %v1196, %v1251
      %v1269 = vadd.f32 %v1197, %v1252
      %v1270 = vadd.f32 %v1198, %v1246
      %1271 = vset.pattern.permute.xlu0 11
      %1272 = vperm.xlu0 %1271, %v761
      %v1273 = vpop.permute.xlu0 %1272
      %1275 = vset.pattern.permute.xlu0 11
      %1276 = vperm.xlu0 %1275, %v762
      %v1277 = vpop.permute.xlu0 %1276
      %1279 = vset.pattern.permute.xlu0 11
      %1280 = vperm.xlu0 %1279, %v763
      %v1281 = vpop.permute.xlu0 %1280
      %v1283 = vmul.f32 %v1273, %v797
      %v1284 = vmul.f32 %v1273, %v798
      %v1285 = vmul.f32 %v1273, %v799
      %v1286 = vmul.f32 %v1277, %v800
      %v1287 = vmul.f32 %v1277, %v801
      %v1288 = vmul.f32 %v1277, %v802
      %v1289 = vmul.f32 %v1281, %v803
      %v1290 = vmul.f32 %v1281, %v804
      %v1291 = vmul.f32 %v1281, %v805
      %1301 = vrot.lane.b32.xlu0 %v1283, 96
      %v1302 = vpop.permute.xlu0 %1301
      %1303 = vrot.lane.b32.xlu0 %v1284, 96
      %v1304 = vpop.permute.xlu0 %1303
      %1305 = vrot.lane.b32.xlu0 %v1285, 96
      %v1306 = vpop.permute.xlu0 %1305
      %1307 = vrot.lane.b32.xlu0 %v1286, 96
      %v1308 = vpop.permute.xlu0 %1307
      %1309 = vrot.lane.b32.xlu0 %v1287, 96
      %v1310 = vpop.permute.xlu0 %1309
      %1311 = vrot.lane.b32.xlu0 %v1288, 96
      %v1312 = vpop.permute.xlu0 %1311
      %1313 = vrot.lane.b32.xlu0 %v1289, 96
      %v1314 = vpop.permute.xlu0 %1313
      %1315 = vrot.lane.b32.xlu0 %v1290, 96
      %v1316 = vpop.permute.xlu0 %1315
      %1317 = vrot.lane.b32.xlu0 %v1291, 96
      %v1318 = vpop.permute.xlu0 %1317
      %v1319 = vsel %vm458, %v1302, %v1304
      %v1320 = vsel %vm458, %v1304, %v1306
      %v1321 = vsel %vm458, %v1308, %v1310
      %v1322 = vsel %vm458, %v1310, %v1312
      %v1323 = vsel %vm458, %v1314, %v1316
      %v1324 = vsel %vm458, %v1316, %v1318
      %v1334 = vadd.f32 %v1262, %v1319
      %v1335 = vadd.f32 %v1263, %v1320
      %v1336 = vadd.f32 %v1264, %v1306
      %v1337 = vadd.f32 %v1265, %v1321
      %v1338 = vadd.f32 %v1266, %v1322
      %v1339 = vadd.f32 %v1267, %v1312
      %v1340 = vadd.f32 %v1268, %v1323
      %v1341 = vadd.f32 %v1269, %v1324
      %v1342 = vadd.f32 %v1270, %v1318
      %v1343 = vmul.f32 %v1334, %v324
      %v1344 = vmul.f32 %v1335, %v328
      %v1345 = vmul.f32 %v1336, %v326
      %v1346 = vmul.f32 %v1337, %v324
      %v1347 = vmul.f32 %v1338, %v328
      %v1348 = vmul.f32 %v1339, %v326
      %v1349 = vmul.f32 %v1340, %v324
      %v1350 = vmul.f32 %v1341, %v328
      %v1351 = vmul.f32 %v1342, %v326
      %1361 = vrot.lane.b32.xlu0 %v1343, 126
      %v1362 = vpop.permute.xlu0 %1361
      %1363 = vrot.lane.b32.xlu0 %v1344, 126
      %v1364 = vpop.permute.xlu0 %1363
      %1365 = vrot.lane.b32.xlu0 %v1345, 126
      %v1366 = vpop.permute.xlu0 %1365
      %1367 = vrot.lane.b32.xlu0 %v1346, 126
      %v1368 = vpop.permute.xlu0 %1367
      %1369 = vrot.lane.b32.xlu0 %v1347, 126
      %v1370 = vpop.permute.xlu0 %1369
      %1371 = vrot.lane.b32.xlu0 %v1348, 126
      %v1372 = vpop.permute.xlu0 %1371
      %1373 = vrot.lane.b32.xlu0 %v1349, 126
      %v1374 = vpop.permute.xlu0 %1373
      %1375 = vrot.lane.b32.xlu0 %v1350, 126
      %v1376 = vpop.permute.xlu0 %1375
      %1377 = vrot.lane.b32.xlu0 %v1351, 126
      %v1378 = vpop.permute.xlu0 %1377
      %v1379 = vsel %vm344, %v1362, %v1364
      %v1380 = vsel %vm344, %v1364, %v1366
      %v1381 = vsel %vm344, %v1368, %v1370
      %v1382 = vsel %vm344, %v1370, %v1372
      %v1383 = vsel %vm344, %v1374, %v1376
      %v1384 = vsel %vm344, %v1376, %v1378
      %v1391 = vadd.f32 %v1163, %v1379
      %v1392 = vadd.f32 %v1164, %v1380
      %v1393 = vadd.f32 %v1165, %v1381
      %v1394 = vadd.f32 %v1166, %v1382
      %v1395 = vadd.f32 %v1167, %v1383
      %v1396 = vadd.f32 %v1168, %v1384
      %1397 = vset.pattern.permute.xlu0 1
      %1398 = vperm.xlu0 %1397, %v761
      %v1399 = vpop.permute.xlu0 %1398
      %1401 = vset.pattern.permute.xlu0 1
      %1402 = vperm.xlu0 %1401, %v762
      %v1403 = vpop.permute.xlu0 %1402
      %1405 = vset.pattern.permute.xlu0 1
      %1406 = vperm.xlu0 %1405, %v763
      %v1407 = vpop.permute.xlu0 %1406
      %v1409 = vadd.f32 %v1391, %v1399
      %v1410 = vadd.f32 %v1392, %v1399
      %v1411 = vadd.f32 %v1393, %v1403
      %v1412 = vadd.f32 %v1394, %v1403
      %v1413 = vadd.f32 %v1395, %v1407
      %v1414 = vadd.f32 %v1396, %v1407
      %v1415 = vand.u32 2147483647, %v1409
      %v1416 = vand.u32 2147483647, %v1410
      %v1417 = vand.u32 2147483647, %v1411
      %v1418 = vand.u32 2147483647, %v1412
      %v1419 = vand.u32 2147483647, %v1413
      %v1420 = vand.u32 2147483647, %v1414
      %v1421 = vsub.f32 0.0, %v1415
      %v1422 = vsub.f32 0.0, %v1416
      %v1423 = vsub.f32 0.0, %v1417
      %v1424 = vsub.f32 0.0, %v1418
      %v1425 = vsub.f32 0.0, %v1419
      %v1426 = vsub.f32 0.0, %v1420
      %v1427 = vmul.f32 %v1421, 1.442695
      %v1428 = vpow.pop %v1427
      %v1429 = vmul.f32 %v1422, 1.442695
      %v1430 = vpow.pop %v1429
      %v1431 = vmul.f32 %v1423, 1.442695
      %v1432 = vpow.pop %v1431
      %v1433 = vmul.f32 %v1424, 1.442695
      %v1434 = vpow.pop %v1433
      %v1435 = vmul.f32 %v1425, 1.442695
      %v1436 = vpow.pop %v1435
      %v1437 = vmul.f32 %v1426, 1.442695
      %v1438 = vpow.pop %v1437
      %v1439 = vadd.f32 %v1428, 1.0
      %v1440 = vadd.f32 %v1430, 1.0
      %v1441 = vadd.f32 %v1432, 1.0
      %v1442 = vadd.f32 %v1434, 1.0
      %v1443 = vadd.f32 %v1436, 1.0
      %v1444 = vadd.f32 %v1438, 1.0
      %v1445 = vrcp.pop %v1439
      %v1446 = vmul.f32 1.0, %v1445
      %v1447 = vrcp.pop %v1440
      %v1448 = vmul.f32 1.0, %v1447
      %v1449 = vrcp.pop %v1441
      %v1450 = vmul.f32 1.0, %v1449
      %v1451 = vrcp.pop %v1442
      %v1452 = vmul.f32 1.0, %v1451
      %v1453 = vrcp.pop %v1443
      %v1454 = vmul.f32 1.0, %v1453
      %v1455 = vrcp.pop %v1444
      %v1456 = vmul.f32 1.0, %v1455
      %vm1457 = vcmp.ge.f32.partialorder %v1409, 0.0
      %vm1458 = vcmp.ge.f32.partialorder %v1410, 0.0
      %vm1459 = vcmp.ge.f32.partialorder %v1411, 0.0
      %vm1460 = vcmp.ge.f32.partialorder %v1412, 0.0
      %vm1461 = vcmp.ge.f32.partialorder %v1413, 0.0
      %vm1462 = vcmp.ge.f32.partialorder %v1414, 0.0
      %v1463 = vsub.f32 1.0, %v1446
      %v1464 = vsub.f32 1.0, %v1448
      %v1465 = vsub.f32 1.0, %v1450
      %v1466 = vsub.f32 1.0, %v1452
      %v1467 = vsub.f32 1.0, %v1454
      %v1468 = vsub.f32 1.0, %v1456
      %v1469 = vsel %vm1457, %v1446, %v1463
      %v1470 = vsel %vm1458, %v1448, %v1464
      %v1471 = vsel %vm1459, %v1450, %v1465
      %v1472 = vsel %vm1460, %v1452, %v1466
      %v1473 = vsel %vm1461, %v1454, %v1467
      %v1474 = vsel %vm1462, %v1456, %v1468
      %v1475 = vmul.f32 %v1409, %v1469
      %v1476 = vmul.f32 %v1410, %v1470
      %v1477 = vmul.f32 %v1411, %v1471
      %v1478 = vmul.f32 %v1412, %v1472
      %v1479 = vmul.f32 %v1413, %v1473
      %v1480 = vmul.f32 %v1414, %v1474
      %v1481 = vadd.f32 %v1475, %v1476
      %1482 = vadd.xlane.f32.xlu0 %v1481
      %v1483 = vpop.xlane.xlu0 %1482
      %v1484 = vadd.f32 %v1477, %v1478
      %1485 = vadd.xlane.f32.xlu0 %v1484
      %v1486 = vpop.xlane.xlu0 %1485
      %v1487 = vadd.f32 %v1479, %v1480
      %1488 = vadd.xlane.f32.xlu0 %v1487
      %v1489 = vpop.xlane.xlu0 %1488
      %v1490 = vmul.f32 %v1483, 0.00390625
      %v1491 = vmul.f32 %v1486, 0.00390625
      %v1492 = vmul.f32 %v1489, 0.00390625
      %v1493 = vmul.f32 %v761, %v1490
      %v1494 = vmul.f32 %v762, %v1491
      %v1495 = vmul.f32 %v763, %v1492
      %vm1496 = vcmask 105568
      %v1497 = vsel %vm1496, %v1493, 0.0
      %v1498 = vsel %vm1496, %v1494, 0.0
      %v1499 = vadd.f32 %v1497, %v1498
      %v1500 = vsel %vm1496, %v1495, 0.0
      %v1501 = vadd.f32 %v1499, %v1500
      %v1502 = vrot.slane %v1501, 4
      %v1503 = vadd.f32 %v1501, %v1502
      %v1504 = vrot.slane %v1503, 2
      %v1505 = vadd.f32 %v1503, %v1504
      %v1506 = vrot.slane %v1505, 1
      %v1507 = vadd.f32 %v1505, %v1506
      %v1508 = vld [vmem:[#allocation4] sm:$0x1]
      %v1510 = vlaneseq
      %v1511 = vshrl.u32 %v1510, 7
      %v1512 = vsub.s32 0, %v1511
      %v1513 = vrot.slane %v1508, %v1512
      %1514 = vrot.lane.b32.xlu0 %v1513, 12
      %v1515 = vpop.permute.xlu0 %1514
      %v1517 = vadd.f32 %v1507, %v1515
      %v1518 = vand.u32 2147483647, %v1517
      %v1519 = vsub.f32 0.0, %v1518
      %v1520 = vmul.f32 %v1519, 1.442695
      %v1521 = vpow.pop %v1520
      %v1522 = vadd.f32 %v1521, 1.0
      %v1523 = vrcp.pop %v1522
      %v1524 = vmul.f32 1.0, %v1523
      %vm1525 = vcmp.ge.f32.partialorder %v1517, 0.0
      %v1526 = vsub.f32 1.0, %v1524
      %v1527 = vsel %vm1525, %v1524, %v1526
      %v1528 = vmul.f32 %v1517, %v1527
      %v1529 = vlaneseq
      %v1530 = vshrl.u32 %v1529, 7
      %v1531 = vsub.s32 0, %v1530
      %v1532 = vrot.slane %v1528, %v1531
      %1534 = vrot.lane.b32.xlu0 %v1532, 1
      %v1535 = vpop.permute.xlu0 %1534
      %v1537 = vmul.f32 %v761, %v1535
      %v1538 = vmul.f32 %v762, %v1535
      %v1539 = vmul.f32 %v763, %v1535
      %v1540 = vadd.f32 %v1537, 0.0
      %v1541 = vadd.f32 %v1538, 0.0
      %v1542 = vadd.f32 %v1539, 0.0
      %1543 = vrot.lane.b32.xlu0 %v761, 11
      %v1544 = vpop.permute.xlu0 %1543
      %1545 = vrot.lane.b32.xlu0 %v762, 11
      %v1546 = vpop.permute.xlu0 %1545
      %1547 = vrot.lane.b32.xlu0 %v763, 11
      %v1548 = vpop.permute.xlu0 %1547
      %v1552 = vadd.f32 %v1540, %v1544
      %v1553 = vadd.f32 %v1541, %v1546
      %v1554 = vadd.f32 %v1542, %v1548
      %v1555 = vand.u32 2147483647, %v1552
      %v1556 = vand.u32 2147483647, %v1553
      %v1557 = vand.u32 2147483647, %v1554
      %v1558 = vsub.f32 0.0, %v1555
      %v1559 = vsub.f32 0.0, %v1556
      %v1560 = vsub.f32 0.0, %v1557
      %v1561 = vmul.f32 %v1558, 1.442695
      %v1562 = vpow.pop %v1561
      %v1563 = vmul.f32 %v1559, 1.442695
      %v1564 = vpow.pop %v1563
      %v1565 = vmul.f32 %v1560, 1.442695
      %v1566 = vpow.pop %v1565
      %v1567 = vadd.f32 %v1562, 1.0
      %v1568 = vadd.f32 %v1564, 1.0
      %v1569 = vadd.f32 %v1566, 1.0
      %v1570 = vrcp.pop %v1567
      %v1571 = vmul.f32 1.0, %v1570
      %v1572 = vrcp.pop %v1568
      %v1573 = vmul.f32 1.0, %v1572
      %v1574 = vrcp.pop %v1569
      %v1575 = vmul.f32 1.0, %v1574
      %vm1576 = vcmp.ge.f32.partialorder %v1552, 0.0
      %vm1577 = vcmp.ge.f32.partialorder %v1553, 0.0
      %vm1578 = vcmp.ge.f32.partialorder %v1554, 0.0
      %v1579 = vsub.f32 1.0, %v1571
      %v1580 = vsub.f32 1.0, %v1573
      %v1581 = vsub.f32 1.0, %v1575
      %v1582 = vsel %vm1576, %v1571, %v1579
      %v1583 = vsel %vm1577, %v1573, %v1580
      %v1584 = vsel %vm1578, %v1575, %v1581
      %1586 = vset.pattern.permute.xlu0 13
      %1587 = vperm.xlu0 %1586, %v1582
      %v1588 = vpop.permute.xlu0 %1587
      %1591 = vset.pattern.permute.xlu0 13
      %1592 = vperm.xlu0 %1591, %v1583
      %v1593 = vpop.permute.xlu0 %1592
      %1596 = vset.pattern.permute.xlu0 13
      %1597 = vperm.xlu0 %1596, %v1584
      %v1598 = vpop.permute.xlu0 %1597
      %v1600 = vmul.f32 %v1475, %v1588
      %v1601 = vmul.f32 %v1476, %v1588
      %v1602 = vmul.f32 %v1477, %v1593
      %v1603 = vmul.f32 %v1478, %v1593
      %v1604 = vmul.f32 %v1479, %v1598
      %v1605 = vmul.f32 %v1480, %v1598
      %v1606 = vld [vmem:[%s2] sm:$0xf]
      %v1607 = vld [vmem:[%s5] sm:$0xf]
      %1609 = vset.pattern.permute.xlu0 0
      %1610 = vperm.xlu0 %1609, %v1607
      %v1611 = vpop.permute.xlu0 %1610
      %vm1613 = vcmask 195584
      %v1615 = vsel %vm1613, %v1606, 0
      %1617 = vmatprep.subr.mxu0 %v1601
      %1618 = vmatpush1.msra.mxu0 %v1600
      %1619 = vmatprep.subr.mxu0 %v1603
      %1620 = vmatpush1.msra.mxu0 %v1602
      %1621 = vmatprep.subr.mxu0 %v1605
      %1622 = vmatpush1.msra.mxu0 %v1604
      %1623 = vmatprep.subr.mxu0 0.0
      %1624 = vmatpush1.msra.mxu0 0.0
      %1625 = vmatprep.subr.mxu0 0.0
      %1626 = vmatpush1.msra.mxu0 0.0
      %1627 = vmatprep.subr.mxu0 0.0
      %1628 = vmatpush1.msra.mxu0 0.0
      %1629 = vmatprep.subr.mxu0 0.0
      %1630 = vmatpush1.msra.mxu0 0.0
      %1631 = vmatprep.subr.mxu0 0.0
      %1632 = vmatpush1.msra.mxu0 0.0
      %1633 = vmatprep.subr.mxu0 0.0
      %1634 = vmatpush1.msra.mxu0 0.0
      %1635 = vmatprep.subr.mxu0 0.0
      %1636 = vmatpush1.msra.mxu0 0.0
      %1637 = vmatprep.subr.mxu0 0.0
      %1638 = vmatpush1.msra.mxu0 0.0
      %1639 = vmatprep.subr.mxu0 0.0
      %1640 = vmatpush1.msra.mxu0 0.0
      %1641 = vmatprep.subr.mxu0 0.0
      %1642 = vmatpush1.msra.mxu0 0.0
      %1643 = vmatprep.subr.mxu0 0.0
      %1644 = vmatpush1.msra.mxu0 0.0
      %1645 = vmatprep.subr.mxu0 0.0
      %1646 = vmatpush1.msra.mxu0 0.0
      %1647 = vmatprep.subr.mxu0 0.0
      %1648 = vmatpush1.msra.mxu0 0.0
      %1649 = vmatprep.subr.mxu0 0.0
      %1650 = vmatpush1.msra.mxu0 0.0
      %1651 = vmatprep.subr.mxu0 0.0
      %1652 = vmatpush1.msra.mxu0 0.0
      %1653 = vmatprep.subr.mxu0 0.0
      %1654 = vmatpush1.msra.mxu0 0.0
      %1655 = vmatprep.subr.mxu0 0.0
      %1656 = vmatpush1.msra.mxu0 0.0
      %1657 = vmatprep.subr.mxu0 0.0
      %1658 = vmatpush1.msra.mxu0 0.0
      %1659 = vmatprep.subr.mxu0 0.0
      %1660 = vmatpush1.msra.mxu0 0.0
      %1661 = vmatprep.subr.mxu0 0.0
      %1662 = vmatpush1.msra.mxu0 0.0
      %1663 = vmatprep.subr.mxu0 0.0
      %1664 = vmatpush1.msra.mxu0 0.0
      %1665 = vmatprep.subr.mxu0 0.0
      %1666 = vmatpush1.msra.mxu0 0.0
      %1667 = vmatprep.subr.mxu0 0.0
      %1668 = vmatpush1.msra.mxu0 0.0
      %1669 = vmatprep.subr.mxu0 0.0
      %1670 = vmatpush1.msra.mxu0 0.0
      %1671 = vmatprep.subr.mxu0 0.0
      %1672 = vmatpush1.msra.mxu0 0.0
      %1673 = vmatprep.subr.mxu0 0.0
      %1674 = vmatpush1.msra.mxu0 0.0
      %1675 = vmatprep.subr.mxu0 0.0
      %1676 = vmatpush1.msra.mxu0 0.0
      %1677 = vmatprep.subr.mxu0 0.0
      %1678 = vmatpush1.msra.mxu0 0.0
      %1679 = vmatprep.subr.mxu0 0.0
      %1680 = vmatpush1.msra.mxu0 0.0
      %1681 = vmatprep.mubr.f32.mxu0 0.0
      %1682 = vmatmul.mubr.f32.gmra.mrb[0].mxu0 %v1615
      %v1683 = vpop.f32.mrb[0].mxu0
      %v1684 = vadd.f32 %v1611, %v1683
      %v1685 = vpop.f32.mrb[0].mxu0
      %v1686 = vadd.f32 %v1611, %v1685
      %1687 = vdwg.mxu0
      %v1688 = vld [vmem:[%s248] sm:$0xf]
      %v1689 = vld [vmem:[%s248 + $0x8] sm:$0xf]
      %v1690 = vld [vmem:[%s248 + $0x10] sm:$0xf]
      %1694 = vrot.lane.b32.xlu0 %v1688, 111
      %v1695 = vpop.permute.xlu0 %1694
      %1696 = vrot.lane.b32.xlu0 %v1689, 111
      %v1697 = vpop.permute.xlu0 %1696
      %1698 = vrot.lane.b32.xlu0 %v1690, 111
      %v1699 = vpop.permute.xlu0 %1698
      %v1700 = vsel %vm396, %v1695, %v1697
      %v1701 = vsel %vm396, %v1697, %v1699
      %v1704 = vadd.f32 %v1684, %v1700
      %v1705 = vadd.f32 %v1686, %v1701
      %v1708 = vcombine.low %v1704, %v1705
      %1710 = vst [vmem:[%s253] sm:$0xff] %v1708
      %p1711 = scmp.lt.s32.totalorder %s19, 1
      %s1712 = scalar_select %p1711, %s19, 1
      %s1713 = smul.addr %s1712, 2
      %s1714 = smul.addr %s1713, 4
      %s1715 = scalar_lea.vmem %s6, %s1714
      // Predicated region
      $region45: #{inverted_residual_forward.1} parent=43 // pred_check
        %p1716 = pneg %p168
      $region46: #{inverted_residual_forward.1} parent=43 // pred_check_branch
        %1718 = sbr.rel (%p1716) target = $region48
      $region47: #{inverted_residual_forward.1} parent=43 // pred_region
        _
      $region48: #{inverted_residual_forward.1} parent=43 // pred_fallthru
        _
    $region44: #{inverted_residual_forward.1} parent=5 // pred_fallthru
      _
    %p1719 = scmp.le.s32.totalorder 2, %s14
    // Predicated region
    $region49: #{inverted_residual_forward.1} parent=5 // pred_check
      %p1720 = pneg %p1719
    $region50: #{inverted_residual_forward.1} parent=5 // pred_check_branch
      %1722 = sbr.rel (%p1720) target = $region52
    $region51: #{inverted_residual_forward.1} parent=5 // pred_region
      %s1723 = ssub.s32 %s14, 2
      // Predicated region
      $region53: #{inverted_residual_forward.1} parent=51 // pred_check
        %p1724 = pneg %p174
      $region54: #{inverted_residual_forward.1} parent=51 // pred_check_branch
        %1726 = sbr.rel (%p1724) target = $region56
      $region55: #{inverted_residual_forward.1} parent=51 // pred_region
        %p1727 = scmp.lt.s32.totalorder %s20, 1
        %s1728 = scalar_select %p1727, %s20, 1
        %s1729 = smul.addr %s1728, 2
        %s1730 = smul.addr %s1729, 4
        %s1731 = scalar_lea.vmem %s6, %s1730
      $region56: #{inverted_residual_forward.1} parent=51 // pred_fallthru
        _
    $region52: #{inverted_residual_forward.1} parent=5 // pred_fallthru
      _
  $region6: #{inverted_residual_forward.1} parent=0 // loop_footer
    %s18 = sadd.s32 1, %s14
  $region7: #{inverted_residual_forward.1} parent=0 // loop_footer_branch
    %13 = sbr.rel target = $region3
  $region8: #{inverted_residual_forward.1} parent=0 // loop_exit
    _

</llo_original>
